<compile_context>
chip_gen: v7x
topology: tpu7x:2x2x1
jax: 0.10.0
libtpu: 0.0.40
codegen_flags: <defaults>
</compile_context>

<pallas_src>
import functools

import jax
import jax.numpy as jnp
from jax.experimental import pallas as pl
from jax.experimental.pallas import tpu as pltpu

F32 = jnp.float32
BF16 = jnp.bfloat16
PAD = 2            # model_config.padding_length (synthetic config)
R1_WEIGHT = 1.0    # model_config.r1_weight      (synthetic config)

LANE = 128
SUB = 8
T_TILE_MAX = 512   # rows of x per grid step (time tiling for long T)


def _round_up(n, m):
    return ((n + m - 1) // m) * m


def _lrelu(x):
    return jnp.where(x > 0, x, 0.2 * x)


def _softplus(v):
    # stable softplus (BCE-with-logits building block)
    return jnp.maximum(v, 0.0) + jnp.log(1.0 + jnp.exp(-jnp.abs(v)))


# --------------------------------------------------------------------------- #
# In-kernel building blocks                                                   #
# --------------------------------------------------------------------------- #

def _store_gamma_beta(s, t_wg_ref, t_bg_ref, t_wb_ref, t_bb_ref, gb_ref):
    """Style transfer modulation (AdaIN-style affine) from style s (1, Sp)."""
    gb_ref[0:1, :] = (jnp.dot(s, t_wg_ref[...], preferred_element_type=F32)
                      + t_bg_ref[...])
    gb_ref[1:2, :] = (jnp.dot(s, t_wb_ref[...], preferred_element_type=F32)
                      + t_bb_ref[...])


def _disc_step(x, gb_ref, acc_ref,
               d_w1_ref, d_w1bf_ref, d_w1t_ref, d_b1_ref, d_w2_ref,
               *, t_tile, pad, seq_len):
    """One time tile: real disc + analytic R1 grad + style transfer + fake disc.

    Accumulates (masked, per-row-summed) vectors into VMEM scratch rows:
      acc[0] : sum over r1 rows of a1 * w2                (real logit numerator)
      acc[1] : sum over mid rows of a2 * w2               (fake logit numerator)
      acc[2] : sum over r1 rows of (dact @ W1^T)^2        (R1 ||grad||^2 num.)
    """
    t_idx = pl.program_id(1)
    li = (jax.lax.broadcasted_iota(jnp.int32, (t_tile, 1), 0)
          + t_idx * t_tile)                                 # global time index
    m_r1 = ((li >= 2 * pad) & (li < seq_len - 2 * pad)).astype(F32)
    m_mid = ((li >= pad) & (li < seq_len - pad)).astype(F32)

    b1 = d_b1_ref[...]                                      # (1, Hp)
    w2 = d_w2_ref[...]                                      # (1, Hp)

    # ---- real branch (f32: feeds the R1 gradient, keep full precision) ------
    h1 = jnp.dot(x, d_w1_ref[...], preferred_element_type=F32) + b1
    a1 = _lrelu(h1)
    acc_ref[0:1, :] = acc_ref[0:1, :] + jnp.sum(m_r1 * (a1 * w2),
                                                axis=0, keepdims=True)

    # ---- analytic d(logit)/d(x): grad = (lrelu'(h1) * w2) @ W1^T ------------
    # slope 0.2 at h1==0 matches jax.grad's jnp.where convention (measure-zero).
    dact = jnp.where(h1 > 0, 1.0, 0.2) * w2                 # (t, Hp)
    grad = jnp.dot(dact, d_w1t_ref[...], preferred_element_type=F32)  # (t, Fp)
    acc_ref[2:3, :] = acc_ref[2:3, :] + jnp.sum(m_r1 * (grad * grad),
                                                axis=0, keepdims=True)

    # ---- style transfer (pointwise in time) + fake branch (bf16 MXU) --------
    gamma = gb_ref[0:1, :]
    beta = gb_ref[1:2, :]
    y = jnp.tanh(x) * (1.0 + gamma) + beta                  # f32 elementwise
    h2 = jnp.dot(y.astype(BF16), d_w1bf_ref[...],
                 preferred_element_type=F32) + b1
    a2 = _lrelu(h2)
    acc_ref[1:2, :] = acc_ref[1:2, :] + jnp.sum(m_mid * (a2 * w2),
                                                axis=0, keepdims=True)


def _finalize(acc_ref, d_b2, out_ref, *, t_r1, t_mid):
    """Per-batch logits -> BCE terms + gsq, packed into one lane-dense row."""
    real = (jnp.sum(acc_ref[0:1, :], axis=1, keepdims=True) * (1.0 / t_r1)
            + d_b2)                                          # (1, 1)
    fake = (jnp.sum(acc_ref[1:2, :], axis=1, keepdims=True) * (1.0 / t_mid)
            + d_b2)
    gsq = jnp.sum(acc_ref[2:3, :], axis=1, keepdims=True) * (1.0 / (t_r1 * t_r1))
    sp_real = _softplus(-real)      # BCE(real, target=1)
    sp_fake = _softplus(fake)       # BCE(fake, target=0)

    row = jax.lax.broadcasted_iota(jnp.int32, (1, SUB, LANE), 1)
    col = jax.lax.broadcasted_iota(jnp.int32, (1, SUB, LANE), 2)

    def hot(k):
        return ((row == 0) & (col == k)).astype(F32)

    out_ref[...] = sp_real * hot(0) + sp_fake * hot(1) + gsq * hot(2)


# --------------------------------------------------------------------------- #
# Fused gridded kernels (one per generation path)                             #
# --------------------------------------------------------------------------- #

def _latent_kernel(x_ref, z_ref,
                   d_w1_ref, d_w1bf_ref, d_w1t_ref, d_b1_ref, d_w2_ref,
                   m_w1_ref, m_b1_ref, m_w2_ref, m_b2_ref,
                   t_wg_ref, t_bg_ref, t_wb_ref, t_bb_ref,
                   d_b2_ref,                  # SMEM scalar (1,)
                   out_ref, acc_ref, gb_ref,
                   *, t_tile, pad, seq_len, t_r1, t_mid):
    t_idx = pl.program_id(1)

    @pl.when(t_idx == 0)
    def _init():
        acc_ref[...] = jnp.zeros_like(acc_ref)
        z = z_ref[0]                                           # (1, Zp)
        h = _lrelu(jnp.dot(z, m_w1_ref[...], preferred_element_type=F32)
                   + m_b1_ref[...])
        s = jnp.dot(h, m_w2_ref[...], preferred_element_type=F32) + m_b2_ref[...]
        _store_gamma_beta(s, t_wg_ref, t_bg_ref, t_wb_ref, t_bb_ref, gb_ref)

    _disc_step(x_ref[0], gb_ref, acc_ref,
               d_w1_ref, d_w1bf_ref, d_w1t_ref, d_b1_ref, d_w2_ref,
               t_tile=t_tile, pad=pad, seq_len=seq_len)

    @pl.when(t_idx == pl.num_programs(1) - 1)
    def _fin():
        _finalize(acc_ref, d_b2_ref[0], out_ref, t_r1=t_r1, t_mid=t_mid)


def _reference_kernel(x_ref, xr_ref,
                      d_w1_ref, d_w1bf_ref, d_w1t_ref, d_b1_ref, d_w2_ref,
                      e_w1_ref, e_b1_ref, e_w2_ref, e_b2_ref,
                      t_wg_ref, t_bg_ref, t_wb_ref, t_bb_ref,
                      d_b2_ref,               # SMEM scalar (1,)
                      out_ref, acc_ref, gb_ref,
                      *, t_tile, pad, seq_len, t_r1, t_mid, ref_len):
    t_idx = pl.program_id(1)

    @pl.when(t_idx == 0)
    def _init():
        acc_ref[...] = jnp.zeros_like(acc_ref)
        xr = xr_ref[0]                                         # (Trp, Fp)
        m = jnp.sum(xr, axis=0, keepdims=True) * (1.0 / ref_len)   # time mean
        h = _lrelu(jnp.dot(m, e_w1_ref[...], preferred_element_type=F32)
                   + e_b1_ref[...])
        s = jnp.dot(h, e_w2_ref[...], preferred_element_type=F32) + e_b2_ref[...]
        _store_gamma_beta(s, t_wg_ref, t_bg_ref, t_wb_ref, t_bb_ref, gb_ref)

    _disc_step(x_ref[0], gb_ref, acc_ref,
               d_w1_ref, d_w1bf_ref, d_w1t_ref, d_b1_ref, d_w2_ref,
               t_tile=t_tile, pad=pad, seq_len=seq_len)

    @pl.when(t_idx == pl.num_programs(1) - 1)
    def _fin():
        _finalize(acc_ref, d_b2_ref[0], out_ref, t_r1=t_r1, t_mid=t_mid)


# --------------------------------------------------------------------------- #
# Forward wrapper (glue: lane/time zero-padding, grid setup, tiny reductions) #
# --------------------------------------------------------------------------- #

def _pad2(a, rows, cols):
    a = a.astype(F32)
    return jnp.pad(a, ((0, rows - a.shape[0]), (0, cols - a.shape[1])))


def _resident_spec(arr):
    # whole array resident in VMEM across the grid (constant block index).
    return pl.BlockSpec(arr.shape, lambda b, t: (0, 0))


@functools.partial(jax.jit, static_argnames=('padding_length', 'r1_weight', 'prefix'))
def discriminator_model_forward(params, x, x_ref, z,
                                padding_length=PAD, r1_weight=R1_WEIGHT,
                                prefix='d'):
    """Mirrors DiscriminatorModel.forward(x, x_ref, z, prefix)."""
    assert (x_ref is None) != (z is None)
    pad = padding_length
    B, T, F = x.shape
    assert T > 4 * pad
    H = params['d_w1'].shape[1]
    S = params['t_wg'].shape[0]
    t_r1 = T - 4 * pad
    t_mid = T - 2 * pad

    Fp = _round_up(F, LANE)
    Hp = _round_up(H, LANE)
    Sp = _round_up(S, LANE)

    # time tiling (multiple of 8 sublanes, capped for bounded VMEM / v7x)
    t_tile = min(_round_up(T, SUB), T_TILE_MAX)
    T_pad = _round_up(T, t_tile)
    n_t = T_pad // t_tile

    # ---- zero-pad inputs / weights to lane-dense shapes (exact; glue) -------
    xp = jnp.pad(x.astype(F32), ((0, 0), (0, T_pad - T), (0, Fp - F)))

    d_w1 = _pad2(params['d_w1'], Fp, Hp)
    d_w1_bf = d_w1.astype(BF16)         # fake-branch MXU operand
    d_w1_t = d_w1.T                     # pre-transposed for the R1 gradient
    d_b1 = _pad2(params['d_b1'], 1, Hp)
    d_w2 = _pad2(params['d_w2'], 1, Hp)
    d_b2 = params['d_b2'].astype(F32).reshape((1,))

    t_wg = _pad2(params['t_wg'], Sp, Fp)
    t_bg = _pad2(params['t_bg'], 1, Fp)
    t_wb = _pad2(params['t_wb'], Sp, Fp)
    t_bb = _pad2(params['t_bb'], 1, Fp)

    disc_args = (d_w1, d_w1_bf, d_w1_t, d_b1, d_w2)
    transfer_args = (t_wg, t_bg, t_wb, t_bb)

    x_spec = pl.BlockSpec((1, t_tile, Fp), lambda b, t: (b, t, 0))
    out_spec = pl.BlockSpec((1, SUB, LANE), lambda b, t: (b, 0, 0))
    smem_spec = pl.BlockSpec(memory_space=pltpu.MemorySpace.SMEM)

    if z is not None:
        Z = z.shape[1]
        Zp = _round_up(Z, LANE)
        z3 = jnp.pad(z.astype(F32), ((0, 0), (0, Zp - Z))).reshape(B, 1, Zp)
        style_args = (_pad2(params['m_w1'], Zp, Hp), _pad2(params['m_b1'], 1, Hp),
                      _pad2(params['m_w2'], Hp, Sp), _pad2(params['m_b2'], 1, Sp))
        kernel = functools.partial(_latent_kernel, t_tile=t_tile, pad=pad,
                                   seq_len=T, t_r1=t_r1, t_mid=t_mid)
        extra_in = (z3,)
        extra_spec = [pl.BlockSpec((1, 1, Zp), lambda b, t: (b, 0, 0))]
    else:
        Tr = x_ref.shape[1]
        Trp = _round_up(Tr, SUB)
        xr = jnp.pad(x_ref.astype(F32), ((0, 0), (0, Trp - Tr), (0, Fp - F)))
        style_args = (_pad2(params['e_w1'], Fp, Hp), _pad2(params['e_b1'], 1, Hp),
                      _pad2(params['e_w2'], Hp, Sp), _pad2(params['e_b2'], 1, Sp))
        kernel = functools.partial(_reference_kernel, t_tile=t_tile, pad=pad,
                                   seq_len=T, t_r1=t_r1, t_mid=t_mid, ref_len=Tr)
        extra_in = (xr,)
        extra_spec = [pl.BlockSpec((1, Trp, Fp), lambda b, t: (b, 0, 0))]

    args = (xp,) + extra_in + disc_args + style_args + transfer_args + (d_b2,)
    in_specs = ([x_spec] + extra_spec
                + [_resident_spec(a) for a in
                   disc_args + style_args + transfer_args]
                + [smem_spec])

    out = pl.pallas_call(
        kernel,
        out_shape=jax.ShapeDtypeStruct((B, SUB, LANE), F32),
        grid_spec=pltpu.PrefetchScalarGridSpec(
            num_scalar_prefetch=0,
            grid=(B, n_t),
            in_specs=in_specs,
            out_specs=out_spec,
            scratch_shapes=[pltpu.VMEM((SUB, LANE), F32),   # acc: rows 0..2
                            pltpu.VMEM((SUB, LANE), F32)],  # gamma/beta rows
        ),
        compiler_params=pltpu.CompilerParams(
            dimension_semantics=("parallel", "arbitrary"),
            vmem_limit_bytes=32 * 1024 * 1024),
    )(*args)

    # tiny XLA glue: reduce per-batch partials to the four loss scalars
    parts = out[:, 0, :]                            # (B, 128): cols 0..2 used
    loss_real = jnp.mean(parts[:, 0])
    loss_fake = jnp.mean(parts[:, 1])
    loss_r1 = 0.5 * jnp.mean(parts[:, 2])
    loss = loss_real + loss_fake + r1_weight * loss_r1

    values = {
        f'{prefix}/loss': loss,
        f'{prefix}/loss_real': loss_real,
        f'{prefix}/loss_fake': loss_fake,
        f'{prefix}/loss_r1': loss_r1,
    }
    return loss, values


def forward_with_latent(params, x, z1):
    return discriminator_model_forward(params, x, None, z1, prefix='latent')


def forward_with_reference(params, x, x_ref1):
    return discriminator_model_forward(params, x, x_ref1, None, prefix='ref')


# --------------------------------------------------------------------------- #
# Deterministic parameter init + pure-JAX reference (for validation)          #
# --------------------------------------------------------------------------- #

def init_params(key, feature, hidden, style, latent):
    ks = jax.random.split(key, 16)

    def w(k, shape):
        return 0.1 * jax.random.normal(k, shape, F32)

    return dict(
        # discriminator
        d_w1=w(ks[0], (feature, hidden)), d_b1=w(ks[1], (1, hidden)),
        d_w2=w(ks[2], (1, hidden)), d_b2=w(ks[3], (1, 1)),
        # mapping network
        m_w1=w(ks[4], (latent, hidden)), m_b1=w(ks[5], (1, hidden)),
        m_w2=w(ks[6], (hidden, style)), m_b2=w(ks[7], (1, style)),
        # style encoder
        e_w1=w(ks[8], (feature, hidden)), e_b1=w(ks[9], (1, hidden)),
        e_w2=w(ks[10], (hidden, style)), e_b2=w(ks[11], (1, style)),
        # style transfer (affine modulation from s)
        t_wg=w(ks[12], (style, feature)), t_bg=w(ks[13], (1, feature)),
        t_wb=w(ks[14], (style, feature)), t_bb=w(ks[15], (1, feature)),
    )


def _ref_lrelu(x):
    return jnp.where(x > 0, x, 0.2 * x)


def _ref_disc_logits(p, x):
    h = jnp.einsum('btf,fh->bth', x, p['d_w1']) + p['d_b1'][None]
    a = _ref_lrelu(h)
    return (jnp.sum(a * p['d_w2'][None], axis=(1, 2))[:, None] / x.shape[1]
            + p['d_b2'])


def _ref_common(p, x, s, pad, r1_weight):
    x_r1 = x[:, pad * 2:-pad * 2]
    real = _ref_disc_logits(p, x_r1)
    grad = jax.grad(lambda xx: jnp.sum(_ref_disc_logits(p, xx)))(x_r1)
    loss_r1 = 0.5 * jnp.mean(jnp.sum(grad ** 2, axis=(1, 2)))
    loss_real = jnp.mean(jax.nn.softplus(-real))
    gamma = s @ p['t_wg'] + p['t_bg']
    beta = s @ p['t_wb'] + p['t_bb']
    y = jnp.tanh(x) * (1.0 + gamma)[:, None, :] + beta[:, None, :]
    fake = _ref_disc_logits(p, y[:, pad:-pad])
    loss_fake = jnp.mean(jax.nn.softplus(fake))
    return loss_real + loss_fake + r1_weight * loss_r1, loss_r1


@jax.jit
def _ref_forward_latent(p, x, z, pad=PAD, r1_weight=R1_WEIGHT):
    s = _ref_lrelu(z @ p['m_w1'] + p['m_b1']) @ p['m_w2'] + p['m_b2']
    return _ref_common(p, x, s, pad, r1_weight)


@jax.jit
def _ref_forward_reference(p, x, x_ref, pad=PAD, r1_weight=R1_WEIGHT):
    m = jnp.mean(x_ref, axis=1)
    s = _ref_lrelu(m @ p['e_w1'] + p['e_b1']) @ p['e_w2'] + p['e_b2']
    return _ref_common(p, x, s, pad, r1_weight)


# --------------------------------------------------------------------------- #

if __name__ == '__main__':
    key = jax.random.PRNGKey(0)
    k_x, k_r, k_z, k_p, k_x2, k_z2 = jax.random.split(key, 6)

    B, T, FEAT = 2, 32, 8          # batch, time (> 4*pad), feature
    HID, STYLE, LATENT = 16, 8, 8

    x = jax.random.normal(k_x, (B, T, FEAT), F32)
    x_ref1 = jax.random.normal(k_r, (B, T, FEAT), F32)
    z1 = jax.random.normal(k_z, (B, LATENT), F32)
    params = init_params(k_p, FEAT, HID, STYLE, LATENT)

    loss_latent, vals_latent = forward_with_latent(params, x, z1)          # z path
    loss_refpath, vals_refpath = forward_with_reference(params, x, x_ref1)  # x_ref path

    # longer T exercises the multi-tile grid accumulation (n_t > 1) + time padding
    T2 = 640
    x2 = jax.random.normal(k_x2, (B, T2, FEAT), F32)
    z2 = jax.random.normal(k_z2, (B, LATENT), F32)
    loss_big, vals_big = forward_with_latent(params, x2, z2)

    jax.block_until_ready((loss_latent, loss_refpath, loss_big))

    # Cross-check the fused gridded Pallas pipeline (including the in-kernel
    # analytic R1 gradient) against a pure-JAX + jax.grad reference.
    exp_lat, exp_lat_r1 = _ref_forward_latent(params, x, z1)
    exp_ref, exp_ref_r1 = _ref_forward_reference(params, x, x_ref1)
    exp_big, exp_big_r1 = _ref_forward_latent(params, x2, z2)

    assert jnp.allclose(loss_latent, exp_lat, rtol=1e-2, atol=1e-2), (
        float(loss_latent), float(exp_lat))
    assert jnp.allclose(vals_latent['latent/loss_r1'], exp_lat_r1,
                        rtol=5e-2, atol=1e-6), (
        float(vals_latent['latent/loss_r1']), float(exp_lat_r1))
    assert jnp.allclose(loss_refpath, exp_ref, rtol=1e-2, atol=1e-2), (
        float(loss_refpath), float(exp_ref))
    assert jnp.allclose(vals_refpath['ref/loss_r1'], exp_ref_r1,
                        rtol=5e-2, atol=1e-6), (
        float(vals_refpath['ref/loss_r1']), float(exp_ref_r1))
    assert jnp.allclose(loss_big, exp_big, rtol=1e-2, atol=1e-2), (
        float(loss_big), float(exp_big))
    assert jnp.allclose(vals_big['latent/loss_r1'], exp_big_r1,
                        rtol=5e-2, atol=1e-6), (
        float(vals_big['latent/loss_r1']), float(exp_big_r1))

    print("KERNEL_OK")
</pallas_src>

<mosaic_0001>
module attributes {stable_mosaic.version = 11 : i64} {
  func.func @_latent_kernel(%arg0: i32, %arg1: i32, %arg2: memref<1x32x128xf32, #tpu.memory_space<vmem>>, %arg3: memref<1x1x128xf32, #tpu.memory_space<vmem>>, %arg4: memref<128x128xf32, #tpu.memory_space<vmem>>, %arg5: memref<128x128xbf16, #tpu.memory_space<vmem>>, %arg6: memref<128x128xf32, #tpu.memory_space<vmem>>, %arg7: memref<1x128xf32, #tpu.memory_space<vmem>>, %arg8: memref<1x128xf32, #tpu.memory_space<vmem>>, %arg9: memref<128x128xf32, #tpu.memory_space<vmem>>, %arg10: memref<1x128xf32, #tpu.memory_space<vmem>>, %arg11: memref<128x128xf32, #tpu.memory_space<vmem>>, %arg12: memref<1x128xf32, #tpu.memory_space<vmem>>, %arg13: memref<128x128xf32, #tpu.memory_space<vmem>>, %arg14: memref<1x128xf32, #tpu.memory_space<vmem>>, %arg15: memref<128x128xf32, #tpu.memory_space<vmem>>, %arg16: memref<1x128xf32, #tpu.memory_space<vmem>>, %arg17: memref<1xf32, #tpu.memory_space<smem>>, %arg18: memref<1x8x128xf32, #tpu.memory_space<vmem>>, %arg19: memref<8x128xf32, #tpu.memory_space<vmem>>, %arg20: memref<8x128xf32, #tpu.memory_space<vmem>>) attributes {dimension_semantics = [#tpu.dimension_semantics<parallel>, #tpu.dimension_semantics<arbitrary>], iteration_bounds = array<i64: 2, 1>, scalar_prefetch = 0 : i64, scratch_operands = 2 : i64, tpu.core_type = #tpu.core_type<tc>, window_params = [{transform_indices = @transform_0, window_bounds = array<i64: 1, 32, 128>}, {transform_indices = @transform_1, window_bounds = array<i64: 1, 1, 128>}, {pipeline_mode = #tpu.pipeline_mode<synchronous>, transform_indices = @transform_2, window_bounds = array<i64: 128, 128>}, {pipeline_mode = #tpu.pipeline_mode<synchronous>, transform_indices = @transform_3, window_bounds = array<i64: 128, 128>}, {pipeline_mode = #tpu.pipeline_mode<synchronous>, transform_indices = @transform_4, window_bounds = array<i64: 128, 128>}, {pipeline_mode = #tpu.pipeline_mode<synchronous>, transform_indices = @transform_5, window_bounds = array<i64: 1, 128>}, {pipeline_mode = #tpu.pipeline_mode<synchronous>, transform_indices = @transform_6, window_bounds = array<i64: 1, 128>}, {pipeline_mode = #tpu.pipeline_mode<synchronous>, transform_indices = @transform_7, window_bounds = array<i64: 128, 128>}, {pipeline_mode = #tpu.pipeline_mode<synchronous>, transform_indices = @transform_8, window_bounds = array<i64: 1, 128>}, {pipeline_mode = #tpu.pipeline_mode<synchronous>, transform_indices = @transform_9, window_bounds = array<i64: 128, 128>}, {pipeline_mode = #tpu.pipeline_mode<synchronous>, transform_indices = @transform_10, window_bounds = array<i64: 1, 128>}, {pipeline_mode = #tpu.pipeline_mode<synchronous>, transform_indices = @transform_11, window_bounds = array<i64: 128, 128>}, {pipeline_mode = #tpu.pipeline_mode<synchronous>, transform_indices = @transform_12, window_bounds = array<i64: 1, 128>}, {pipeline_mode = #tpu.pipeline_mode<synchronous>, transform_indices = @transform_13, window_bounds = array<i64: 128, 128>}, {pipeline_mode = #tpu.pipeline_mode<synchronous>, transform_indices = @transform_14, window_bounds = array<i64: 1, 128>}, {transform_indices = @transform_15, window_bounds = array<i64: 1>}, {transform_indices = @transform_16, window_bounds = array<i64: 1, 8, 128>}]} {
    %c0_i32 = arith.constant 0 : i32
    %0 = arith.cmpi eq, %arg1, %c0_i32 : i32
    %1 = arith.extui %0 : i1 to i32
    %c0_i32_0 = arith.constant 0 : i32
    %2 = arith.cmpi ne, %1, %c0_i32_0 : i32
    scf.if %2 {
      %cst_42 = arith.constant 0.000000e+00 : f32
      %91 = vector.broadcast %cst_42 : f32 to vector<8x128xf32>
      %c0_43 = arith.constant 0 : index
      %c0_44 = arith.constant 0 : index
      %92 = vector.load %arg19[%c0_43, %c0_44] : memref<8x128xf32, #tpu.memory_space<vmem>>, vector<8x128xf32>
      tpu.vector_store %arg19[%c0_43, %c0_44], %91 {strides = array<i32>} : memref<8x128xf32, #tpu.memory_space<vmem>>, vector<8x128xf32>,
      %c0_45 = arith.constant 0 : index
      %c0_46 = arith.constant 0 : index
      %c0_47 = arith.constant 0 : index
      %93 = vector.load %arg3[%c0_45, %c0_46, %c0_47] : memref<1x1x128xf32, #tpu.memory_space<vmem>>, vector<1x1x128xf32>
      %94 = vector.shape_cast %93 : vector<1x1x128xf32> to vector<1x128xf32>
      %c0_48 = arith.constant 0 : index
      %c0_49 = arith.constant 0 : index
      %95 = vector.load %arg9[%c0_48, %c0_49] : memref<128x128xf32, #tpu.memory_space<vmem>>, vector<128x128xf32>
      %cst_50 = arith.constant dense<0.000000e+00> : vector<1x128xf32>
      %96 = tpu.matmul %94, %95, %cst_50 {dimension_numbers = #tpu.dot_dimension_numbers<[1], [0], [0], [1], [0, 0, 1, 1], [], []>} : vector<1x128xf32>, vector<128x128xf32>, vector<1x128xf32> -> vector<1x128xf32>
      %c0_51 = arith.constant 0 : index
      %c0_52 = arith.constant 0 : index
      %97 = vector.load %arg10[%c0_51, %c0_52] : memref<1x128xf32, #tpu.memory_space<vmem>>, vector<1x128xf32>
      %98 = arith.addf %96, %97 : vector<1x128xf32>
      %cst_53 = arith.constant 0.000000e+00 : f32
      %99 = vector.broadcast %cst_53 : f32 to vector<1x128xf32>
      %100 = arith.cmpf ogt, %98, %99 : vector<1x128xf32>
      %cst_54 = arith.constant 2.000000e-01 : f32
      %101 = vector.broadcast %cst_54 : f32 to vector<1x128xf32>
      %102 = arith.mulf %101, %98 : vector<1x128xf32>
      %103 = arith.select %100, %98, %102 : vector<1x128xi1>, vector<1x128xf32>
      %c0_55 = arith.constant 0 : index
      %c0_56 = arith.constant 0 : index
      %104 = vector.load %arg11[%c0_55, %c0_56] : memref<128x128xf32, #tpu.memory_space<vmem>>, vector<128x128xf32>
      %cst_57 = arith.constant dense<0.000000e+00> : vector<1x128xf32>
      %105 = tpu.matmul %103, %104, %cst_57 {dimension_numbers = #tpu.dot_dimension_numbers<[1], [0], [0], [1], [0, 0, 1, 1], [], []>} : vector<1x128xf32>, vector<128x128xf32>, vector<1x128xf32> -> vector<1x128xf32>
      %c0_58 = arith.constant 0 : index
      %c0_59 = arith.constant 0 : index
      %106 = vector.load %arg12[%c0_58, %c0_59] : memref<1x128xf32, #tpu.memory_space<vmem>>, vector<1x128xf32>
      %107 = arith.addf %105, %106 : vector<1x128xf32>
      %c0_60 = arith.constant 0 : index
      %c0_61 = arith.constant 0 : index
      %108 = vector.load %arg13[%c0_60, %c0_61] : memref<128x128xf32, #tpu.memory_space<vmem>>, vector<128x128xf32>
      %cst_62 = arith.constant dense<0.000000e+00> : vector<1x128xf32>
      %109 = tpu.matmul %107, %108, %cst_62 {dimension_numbers = #tpu.dot_dimension_numbers<[1], [0], [0], [1], [0, 0, 1, 1], [], []>} : vector<1x128xf32>, vector<128x128xf32>, vector<1x128xf32> -> vector<1x128xf32>
      %c0_63 = arith.constant 0 : index
      %c0_64 = arith.constant 0 : index
      %110 = vector.load %arg14[%c0_63, %c0_64] : memref<1x128xf32, #tpu.memory_space<vmem>>, vector<1x128xf32>
      %111 = arith.addf %109, %110 : vector<1x128xf32>
      %c0_65 = arith.constant 0 : index
      %c0_66 = arith.constant 0 : index
      %112 = vector.load %arg20[%c0_65, %c0_66] : memref<8x128xf32, #tpu.memory_space<vmem>>, vector<1x128xf32>
      tpu.vector_store %arg20[%c0_65, %c0_66], %111 {strides = array<i32>} : memref<8x128xf32, #tpu.memory_space<vmem>>, vector<1x128xf32>,
      %c0_67 = arith.constant 0 : index
      %c0_68 = arith.constant 0 : index
      %113 = vector.load %arg15[%c0_67, %c0_68] : memref<128x128xf32, #tpu.memory_space<vmem>>, vector<128x128xf32>
      %cst_69 = arith.constant dense<0.000000e+00> : vector<1x128xf32>
      %114 = tpu.matmul %107, %113, %cst_69 {dimension_numbers = #tpu.dot_dimension_numbers<[1], [0], [0], [1], [0, 0, 1, 1], [], []>} : vector<1x128xf32>, vector<128x128xf32>, vector<1x128xf32> -> vector<1x128xf32>
      %c0_70 = arith.constant 0 : index
      %c0_71 = arith.constant 0 : index
      %115 = vector.load %arg16[%c0_70, %c0_71] : memref<1x128xf32, #tpu.memory_space<vmem>>, vector<1x128xf32>
      %116 = arith.addf %114, %115 : vector<1x128xf32>
      %c1_72 = arith.constant 1 : index
      %c0_73 = arith.constant 0 : index
      %117 = vector.load %arg20[%c1_72, %c0_73] : memref<8x128xf32, #tpu.memory_space<vmem>>, vector<1x128xf32>
      tpu.vector_store %arg20[%c1_72, %c0_73], %116 {strides = array<i32>} : memref<8x128xf32, #tpu.memory_space<vmem>>, vector<1x128xf32>,
    } else {
    }
    %c0 = arith.constant 0 : index
    %c0_1 = arith.constant 0 : index
    %c0_2 = arith.constant 0 : index
    %3 = vector.load %arg2[%c0, %c0_1, %c0_2] : memref<1x32x128xf32, #tpu.memory_space<vmem>>, vector<1x32x128xf32>
    %4 = vector.shape_cast %3 : vector<1x32x128xf32> to vector<32x128xf32>
    %5 = tpu.iota {dimensions = array<i32: 0>} : vector<32x1xi32>
    %c32_i32 = arith.constant 32 : i32
    %6 = arith.muli %arg1, %c32_i32 : i32
    %7 = vector.broadcast %6 : i32 to vector<32x1xi32>
    %8 = arith.addi %5, %7 : vector<32x1xi32>
    %c4_i32 = arith.constant 4 : i32
    %9 = vector.broadcast %c4_i32 : i32 to vector<32x1xi32>
    %10 = arith.cmpi sge, %8, %9 : vector<32x1xi32>
    %c28_i32 = arith.constant 28 : i32
    %11 = vector.broadcast %c28_i32 : i32 to vector<32x1xi32>
    %12 = arith.cmpi slt, %8, %11 : vector<32x1xi32>
    %13 = arith.andi %10, %12 : vector<32x1xi1>
    %14 = arith.extui %13 : vector<32x1xi1> to vector<32x1xi32>
    %15 = arith.sitofp %14 : vector<32x1xi32> to vector<32x1xf32>
    %c2_i32 = arith.constant 2 : i32
    %16 = vector.broadcast %c2_i32 : i32 to vector<32x1xi32>
    %17 = arith.cmpi sge, %8, %16 : vector<32x1xi32>
    %c30_i32 = arith.constant 30 : i32
    %18 = vector.broadcast %c30_i32 : i32 to vector<32x1xi32>
    %19 = arith.cmpi slt, %8, %18 : vector<32x1xi32>
    %20 = arith.andi %17, %19 : vector<32x1xi1>
    %21 = arith.extui %20 : vector<32x1xi1> to vector<32x1xi32>
    %22 = arith.sitofp %21 : vector<32x1xi32> to vector<32x1xf32>
    %c0_3 = arith.constant 0 : index
    %c0_4 = arith.constant 0 : index
    %23 = vector.load %arg7[%c0_3, %c0_4] : memref<1x128xf32, #tpu.memory_space<vmem>>, vector<1x128xf32>
    %c0_5 = arith.constant 0 : index
    %c0_6 = arith.constant 0 : index
    %24 = vector.load %arg8[%c0_5, %c0_6] : memref<1x128xf32, #tpu.memory_space<vmem>>, vector<1x128xf32>
    %c0_7 = arith.constant 0 : index
    %c0_8 = arith.constant 0 : index
    %25 = vector.load %arg4[%c0_7, %c0_8] : memref<128x128xf32, #tpu.memory_space<vmem>>, vector<128x128xf32>
    %cst = arith.constant dense<0.000000e+00> : vector<32x128xf32>
    %26 = tpu.matmul %4, %25, %cst {dimension_numbers = #tpu.dot_dimension_numbers<[1], [0], [0], [1], [0, 0, 1, 1], [], []>} : vector<32x128xf32>, vector<128x128xf32>, vector<32x128xf32> -> vector<32x128xf32>
    %27 = vector.broadcast %23 : vector<1x128xf32> to vector<32x128xf32>
    %28 = arith.addf %26, %27 : vector<32x128xf32>
    %cst_9 = arith.constant 0.000000e+00 : f32
    %29 = vector.broadcast %cst_9 : f32 to vector<32x128xf32>
    %30 = arith.cmpf ogt, %28, %29 : vector<32x128xf32>
    %cst_10 = arith.constant 2.000000e-01 : f32
    %31 = vector.broadcast %cst_10 : f32 to vector<32x128xf32>
    %32 = arith.mulf %31, %28 : vector<32x128xf32>
    %33 = arith.select %30, %28, %32 : vector<32x128xi1>, vector<32x128xf32>
    %c0_11 = arith.constant 0 : index
    %c0_12 = arith.constant 0 : index
    %34 = vector.load %arg19[%c0_11, %c0_12] : memref<8x128xf32, #tpu.memory_space<vmem>>, vector<1x128xf32>
    %35 = vector.broadcast %24 : vector<1x128xf32> to vector<32x128xf32>
    %36 = arith.mulf %33, %35 : vector<32x128xf32>
    %37 = vector.broadcast %15 : vector<32x1xf32> to vector<32x128xf32>
    %38 = arith.mulf %37, %36 : vector<32x128xf32>
    %cst_13 = arith.constant dense<0.000000e+00> : vector<128xf32>
    %39 = vector.multi_reduction <add>, %38, %cst_13 [0] : vector<32x128xf32> to vector<128xf32>
    %40 = vector.shape_cast %39 : vector<128xf32> to vector<1x128xf32>
    %41 = arith.addf %34, %40 : vector<1x128xf32>
    %c0_14 = arith.constant 0 : index
    %c0_15 = arith.constant 0 : index
    %42 = vector.load %arg19[%c0_14, %c0_15] : memref<8x128xf32, #tpu.memory_space<vmem>>, vector<1x128xf32>
    tpu.vector_store %arg19[%c0_14, %c0_15], %41 {strides = array<i32>} : memref<8x128xf32, #tpu.memory_space<vmem>>, vector<1x128xf32>,
    %cst_16 = arith.constant 0.000000e+00 : f32
    %43 = vector.broadcast %cst_16 : f32 to vector<32x128xf32>
    %44 = arith.cmpf ogt, %28, %43 : vector<32x128xf32>
    %cst_17 = arith.constant 1.000000e+00 : f32
    %cst_18 = arith.constant 2.000000e-01 : f32
    %45 = vector.broadcast %cst_17 : f32 to vector<32x128xf32>
    %46 = vector.broadcast %cst_18 : f32 to vector<32x128xf32>
    %47 = arith.select %44, %45, %46 : vector<32x128xi1>, vector<32x128xf32>
    %48 = vector.broadcast %24 : vector<1x128xf32> to vector<32x128xf32>
    %49 = arith.mulf %47, %48 : vector<32x128xf32>
    %c0_19 = arith.constant 0 : index
    %c0_20 = arith.constant 0 : index
    %50 = vector.load %arg6[%c0_19, %c0_20] : memref<128x128xf32, #tpu.memory_space<vmem>>, vector<128x128xf32>
    %cst_21 = arith.constant dense<0.000000e+00> : vector<32x128xf32>
    %51 = tpu.matmul %49, %50, %cst_21 {dimension_numbers = #tpu.dot_dimension_numbers<[1], [0], [0], [1], [0, 0, 1, 1], [], []>} : vector<32x128xf32>, vector<128x128xf32>, vector<32x128xf32> -> vector<32x128xf32>
    %c2 = arith.constant 2 : index
    %c0_22 = arith.constant 0 : index
    %52 = vector.load %arg19[%c2, %c0_22] : memref<8x128xf32, #tpu.memory_space<vmem>>, vector<1x128xf32>
    %53 = arith.mulf %51, %51 : vector<32x128xf32>
    %54 = vector.broadcast %15 : vector<32x1xf32> to vector<32x128xf32>
    %55 = arith.mulf %54, %53 : vector<32x128xf32>
    %cst_23 = arith.constant dense<0.000000e+00> : vector<128xf32>
    %56 = vector.multi_reduction <add>, %55, %cst_23 [0] : vector<32x128xf32> to vector<128xf32>
    %57 = vector.shape_cast %56 : vector<128xf32> to vector<1x128xf32>
    %58 = arith.addf %52, %57 : vector<1x128xf32>
    %c2_24 = arith.constant 2 : index
    %c0_25 = arith.constant 0 : index
    %59 = vector.load %arg19[%c2_24, %c0_25] : memref<8x128xf32, #tpu.memory_space<vmem>>, vector<1x128xf32>
    tpu.vector_store %arg19[%c2_24, %c0_25], %58 {strides = array<i32>} : memref<8x128xf32, #tpu.memory_space<vmem>>, vector<1x128xf32>,
    %c0_26 = arith.constant 0 : index
    %c0_27 = arith.constant 0 : index
    %60 = vector.load %arg20[%c0_26, %c0_27] : memref<8x128xf32, #tpu.memory_space<vmem>>, vector<1x128xf32>
    %c1 = arith.constant 1 : index
    %c0_28 = arith.constant 0 : index
    %61 = vector.load %arg20[%c1, %c0_28] : memref<8x128xf32, #tpu.memory_space<vmem>>, vector<1x128xf32>
    %62 = math.tanh %4 : vector<32x128xf32>
    %cst_29 = arith.constant 1.000000e+00 : f32
    %63 = vector.broadcast %cst_29 : f32 to vector<1x128xf32>
    %64 = arith.addf %63, %60 : vector<1x128xf32>
    %65 = vector.broadcast %64 : vector<1x128xf32> to vector<32x128xf32>
    %66 = arith.mulf %62, %65 : vector<32x128xf32>
    %67 = vector.broadcast %61 : vector<1x128xf32> to vector<32x128xf32>
    %68 = arith.addf %66, %67 : vector<32x128xf32>
    %69 = arith.truncf %68 : vector<32x128xf32> to vector<32x128xbf16>
    %c0_30 = arith.constant 0 : index
    %c0_31 = arith.constant 0 : index
    %70 = vector.load %arg5[%c0_30, %c0_31] : memref<128x128xbf16, #tpu.memory_space<vmem>>, vector<128x128xbf16>
    %cst_32 = arith.constant dense<0.000000e+00> : vector<32x128xf32>
    %71 = tpu.matmul %69, %70, %cst_32 {dimension_numbers = #tpu.dot_dimension_numbers<[1], [0], [0], [1], [0, 0, 1, 1], [], []>} : vector<32x128xbf16>, vector<128x128xbf16>, vector<32x128xf32> -> vector<32x128xf32>
    %72 = vector.broadcast %23 : vector<1x128xf32> to vector<32x128xf32>
    %73 = arith.addf %71, %72 : vector<32x128xf32>
    %cst_33 = arith.constant 0.000000e+00 : f32
    %74 = vector.broadcast %cst_33 : f32 to vector<32x128xf32>
    %75 = arith.cmpf ogt, %73, %74 : vector<32x128xf32>
    %cst_34 = arith.constant 2.000000e-01 : f32
    %76 = vector.broadcast %cst_34 : f32 to vector<32x128xf32>
    %77 = arith.mulf %76, %73 : vector<32x128xf32>
    %78 = arith.select %75, %73, %77 : vector<32x128xi1>, vector<32x128xf32>
    %c1_35 = arith.constant 1 : index
    %c0_36 = arith.constant 0 : index
    %79 = vector.load %arg19[%c1_35, %c0_36] : memref<8x128xf32, #tpu.memory_space<vmem>>, vector<1x128xf32>
    %80 = vector.broadcast %24 : vector<1x128xf32> to vector<32x128xf32>
    %81 = arith.mulf %78, %80 : vector<32x128xf32>
    %82 = vector.broadcast %22 : vector<32x1xf32> to vector<32x128xf32>
    %83 = arith.mulf %82, %81 : vector<32x128xf32>
    %cst_37 = arith.constant dense<0.000000e+00> : vector<128xf32>
    %84 = vector.multi_reduction <add>, %83, %cst_37 [0] : vector<32x128xf32> to vector<128xf32>
    %85 = vector.shape_cast %84 : vector<128xf32> to vector<1x128xf32>
    %86 = arith.addf %79, %85 : vector<1x128xf32>
    %c1_38 = arith.constant 1 : index
    %c0_39 = arith.constant 0 : index
    %87 = vector.load %arg19[%c1_38, %c0_39] : memref<8x128xf32, #tpu.memory_space<vmem>>, vector<1x128xf32>
    tpu.vector_store %arg19[%c1_38, %c0_39], %86 {strides = array<i32>} : memref<8x128xf32, #tpu.memory_space<vmem>>, vector<1x128xf32>,
    %c0_i32_40 = arith.constant 0 : i32
    %88 = arith.cmpi eq, %arg1, %c0_i32_40 : i32
    %89 = arith.extui %88 : i1 to i32
    %c0_i32_41 = arith.constant 0 : i32
    %90 = arith.cmpi ne, %89, %c0_i32_41 : i32
    scf.if %90 {
      %c0_42 = arith.constant 0 : index
      %91 = memref.load %arg17[%c0_42] : memref<1xf32, #tpu.memory_space<smem>>
      %c0_43 = arith.constant 0 : index
      %c0_44 = arith.constant 0 : index
      %92 = vector.load %arg19[%c0_43, %c0_44] : memref<8x128xf32, #tpu.memory_space<vmem>>, vector<1x128xf32>
      %cst_45 = arith.constant dense<0.000000e+00> : vector<1xf32>
      %93 = vector.multi_reduction <add>, %92, %cst_45 [1] : vector<1x128xf32> to vector<1xf32>
      %94 = vector.shape_cast %93 : vector<1xf32> to vector<1x1xf32>
      %cst_46 = arith.constant 0.0416666679 : f32
      %95 = vector.broadcast %cst_46 : f32 to vector<1x1xf32>
      %96 = arith.mulf %94, %95 : vector<1x1xf32>
      %97 = vector.broadcast %91 : f32 to vector<1x1xf32>
      %98 = arith.addf %96, %97 : vector<1x1xf32>
      %c1_47 = arith.constant 1 : index
      %c0_48 = arith.constant 0 : index
      %99 = vector.load %arg19[%c1_47, %c0_48] : memref<8x128xf32, #tpu.memory_space<vmem>>, vector<1x128xf32>
      %cst_49 = arith.constant dense<0.000000e+00> : vector<1xf32>
      %100 = vector.multi_reduction <add>, %99, %cst_49 [1] : vector<1x128xf32> to vector<1xf32>
      %101 = vector.shape_cast %100 : vector<1xf32> to vector<1x1xf32>
      %cst_50 = arith.constant 0.0357142873 : f32
      %102 = vector.broadcast %cst_50 : f32 to vector<1x1xf32>
      %103 = arith.mulf %101, %102 : vector<1x1xf32>
      %104 = vector.broadcast %91 : f32 to vector<1x1xf32>
      %105 = arith.addf %103, %104 : vector<1x1xf32>
      %c2_51 = arith.constant 2 : index
      %c0_52 = arith.constant 0 : index
      %106 = vector.load %arg19[%c2_51, %c0_52] : memref<8x128xf32, #tpu.memory_space<vmem>>, vector<1x128xf32>
      %cst_53 = arith.constant dense<0.000000e+00> : vector<1xf32>
      %107 = vector.multi_reduction <add>, %106, %cst_53 [1] : vector<1x128xf32> to vector<1xf32>
      %108 = vector.shape_cast %107 : vector<1xf32> to vector<1x1xf32>
      %cst_54 = arith.constant 0.00173611112 : f32
      %109 = vector.broadcast %cst_54 : f32 to vector<1x1xf32>
      %110 = arith.mulf %108, %109 : vector<1x1xf32>
      %cst_55 = arith.constant 0.000000e+00 : f32
      %111 = vector.broadcast %cst_55 : f32 to vector<1x1xf32>
      %112 = arith.subf %111, %98 : vector<1x1xf32>
      %cst_56 = arith.constant 0.000000e+00 : f32
      %113 = vector.broadcast %cst_56 : f32 to vector<1x1xf32>
      %114 = arith.maximumf %112, %113 : vector<1x1xf32>
      %115 = math.absf %112 : vector<1x1xf32>
      %cst_57 = arith.constant 0.000000e+00 : f32
      %116 = vector.broadcast %cst_57 : f32 to vector<1x1xf32>
      %117 = arith.subf %116, %115 : vector<1x1xf32>
      %118 = math.exp %117 : vector<1x1xf32>
      %cst_58 = arith.constant 1.000000e+00 : f32
      %119 = vector.broadcast %cst_58 : f32 to vector<1x1xf32>
      %120 = arith.addf %119, %118 : vector<1x1xf32>
      %121 = math.log %120 : vector<1x1xf32>
      %122 = arith.addf %114, %121 : vector<1x1xf32>
      %cst_59 = arith.constant 0.000000e+00 : f32
      %123 = vector.broadcast %cst_59 : f32 to vector<1x1xf32>
      %124 = arith.maximumf %105, %123 : vector<1x1xf32>
      %125 = math.absf %105 : vector<1x1xf32>
      %cst_60 = arith.constant 0.000000e+00 : f32
      %126 = vector.broadcast %cst_60 : f32 to vector<1x1xf32>
      %127 = arith.subf %126, %125 : vector<1x1xf32>
      %128 = math.exp %127 : vector<1x1xf32>
      %cst_61 = arith.constant 1.000000e+00 : f32
      %129 = vector.broadcast %cst_61 : f32 to vector<1x1xf32>
      %130 = arith.addf %129, %128 : vector<1x1xf32>
      %131 = math.log %130 : vector<1x1xf32>
      %132 = arith.addf %124, %131 : vector<1x1xf32>
      %133 = tpu.iota {dimensions = array<i32: 1>} : vector<1x8x128xi32>
      %134 = tpu.iota {dimensions = array<i32: 2>} : vector<1x8x128xi32>
      %c0_i32_62 = arith.constant 0 : i32
      %135 = vector.broadcast %c0_i32_62 : i32 to vector<1x8x128xi32>
      %136 = arith.cmpi eq, %133, %135 : vector<1x8x128xi32>
      %c0_i32_63 = arith.constant 0 : i32
      %137 = vector.broadcast %c0_i32_63 : i32 to vector<1x8x128xi32>
      %138 = arith.cmpi eq, %134, %137 : vector<1x8x128xi32>
      %139 = arith.andi %136, %138 : vector<1x8x128xi1>
      %140 = arith.extui %139 : vector<1x8x128xi1> to vector<1x8x128xi32>
      %141 = arith.sitofp %140 : vector<1x8x128xi32> to vector<1x8x128xf32>
      %142 = vector.shape_cast %122 : vector<1x1xf32> to vector<1x1x1xf32>
      %143 = vector.broadcast %142 : vector<1x1x1xf32> to vector<1x8x128xf32>
      %144 = arith.mulf %143, %141 : vector<1x8x128xf32>
      %c0_i32_64 = arith.constant 0 : i32
      %145 = vector.broadcast %c0_i32_64 : i32 to vector<1x8x128xi32>
      %146 = arith.cmpi eq, %133, %145 : vector<1x8x128xi32>
      %c1_i32 = arith.constant 1 : i32
      %147 = vector.broadcast %c1_i32 : i32 to vector<1x8x128xi32>
      %148 = arith.cmpi eq, %134, %147 : vector<1x8x128xi32>
      %149 = arith.andi %146, %148 : vector<1x8x128xi1>
      %150 = arith.extui %149 : vector<1x8x128xi1> to vector<1x8x128xi32>
      %151 = arith.sitofp %150 : vector<1x8x128xi32> to vector<1x8x128xf32>
      %152 = vector.shape_cast %132 : vector<1x1xf32> to vector<1x1x1xf32>
      %153 = vector.broadcast %152 : vector<1x1x1xf32> to vector<1x8x128xf32>
      %154 = arith.mulf %153, %151 : vector<1x8x128xf32>
      %155 = arith.addf %144, %154 : vector<1x8x128xf32>
      %c0_i32_65 = arith.constant 0 : i32
      %156 = vector.broadcast %c0_i32_65 : i32 to vector<1x8x128xi32>
      %157 = arith.cmpi eq, %133, %156 : vector<1x8x128xi32>
      %c2_i32_66 = arith.constant 2 : i32
      %158 = vector.broadcast %c2_i32_66 : i32 to vector<1x8x128xi32>
      %159 = arith.cmpi eq, %134, %158 : vector<1x8x128xi32>
      %160 = arith.andi %157, %159 : vector<1x8x128xi1>
      %161 = arith.extui %160 : vector<1x8x128xi1> to vector<1x8x128xi32>
      %162 = arith.sitofp %161 : vector<1x8x128xi32> to vector<1x8x128xf32>
      %163 = vector.shape_cast %110 : vector<1x1xf32> to vector<1x1x1xf32>
      %164 = vector.broadcast %163 : vector<1x1x1xf32> to vector<1x8x128xf32>
      %165 = arith.mulf %164, %162 : vector<1x8x128xf32>
      %166 = arith.addf %155, %165 : vector<1x8x128xf32>
      %c0_67 = arith.constant 0 : index
      %c0_68 = arith.constant 0 : index
      %c0_69 = arith.constant 0 : index
      %167 = vector.load %arg18[%c0_67, %c0_68, %c0_69] : memref<1x8x128xf32, #tpu.memory_space<vmem>>, vector<1x8x128xf32>
      tpu.vector_store %arg18[%c0_67, %c0_68, %c0_69], %166 {strides = array<i32>} : memref<1x8x128xf32, #tpu.memory_space<vmem>>, vector<1x8x128xf32>,
    } else {
    }
    return
  }
  func.func @transform_0(%arg0: i32, %arg1: i32) -> (i32, i32, i32) {
    %c0_i32 = arith.constant 0 : i32
    %c0_i32_0 = arith.constant 0 : i32
    return %arg0, %arg1, %c0_i32 : i32, i32, i32
  }
  func.func @transform_1(%arg0: i32, %arg1: i32) -> (i32, i32, i32) {
    %c0_i32 = arith.constant 0 : i32
    %c0_i32_0 = arith.constant 0 : i32
    %c0_i32_1 = arith.constant 0 : i32
    return %arg0, %c0_i32, %c0_i32_0 : i32, i32, i32
  }
  func.func @transform_2(%arg0: i32, %arg1: i32) -> (i32, i32) {
    %c0_i32 = arith.constant 0 : i32
    %c0_i32_0 = arith.constant 0 : i32
    %c0_i32_1 = arith.constant 0 : i32
    return %c0_i32, %c0_i32_0 : i32, i32
  }
  func.func @transform_3(%arg0: i32, %arg1: i32) -> (i32, i32) {
    %c0_i32 = arith.constant 0 : i32
    %c0_i32_0 = arith.constant 0 : i32
    %c0_i32_1 = arith.constant 0 : i32
    return %c0_i32, %c0_i32_0 : i32, i32
  }
  func.func @transform_4(%arg0: i32, %arg1: i32) -> (i32, i32) {
    %c0_i32 = arith.constant 0 : i32
    %c0_i32_0 = arith.constant 0 : i32
    %c0_i32_1 = arith.constant 0 : i32
    return %c0_i32, %c0_i32_0 : i32, i32
  }
  func.func @transform_5(%arg0: i32, %arg1: i32) -> (i32, i32) {
    %c0_i32 = arith.constant 0 : i32
    %c0_i32_0 = arith.constant 0 : i32
    %c0_i32_1 = arith.constant 0 : i32
    return %c0_i32, %c0_i32_0 : i32, i32
  }
  func.func @transform_6(%arg0: i32, %arg1: i32) -> (i32, i32) {
    %c0_i32 = arith.constant 0 : i32
    %c0_i32_0 = arith.constant 0 : i32
    %c0_i32_1 = arith.constant 0 : i32
    return %c0_i32, %c0_i32_0 : i32, i32
  }
  func.func @transform_7(%arg0: i32, %arg1: i32) -> (i32, i32) {
    %c0_i32 = arith.constant 0 : i32
    %c0_i32_0 = arith.constant 0 : i32
    %c0_i32_1 = arith.constant 0 : i32
    return %c0_i32, %c0_i32_0 : i32, i32
  }
  func.func @transform_8(%arg0: i32, %arg1: i32) -> (i32, i32) {
    %c0_i32 = arith.constant 0 : i32
    %c0_i32_0 = arith.constant 0 : i32
    %c0_i32_1 = arith.constant 0 : i32
    return %c0_i32, %c0_i32_0 : i32, i32
  }
  func.func @transform_9(%arg0: i32, %arg1: i32) -> (i32, i32) {
    %c0_i32 = arith.constant 0 : i32
    %c0_i32_0 = arith.constant 0 : i32
    %c0_i32_1 = arith.constant 0 : i32
    return %c0_i32, %c0_i32_0 : i32, i32
  }
  func.func @transform_10(%arg0: i32, %arg1: i32) -> (i32, i32) {
    %c0_i32 = arith.constant 0 : i32
    %c0_i32_0 = arith.constant 0 : i32
    %c0_i32_1 = arith.constant 0 : i32
    return %c0_i32, %c0_i32_0 : i32, i32
  }
  func.func @transform_11(%arg0: i32, %arg1: i32) -> (i32, i32) {
    %c0_i32 = arith.constant 0 : i32
    %c0_i32_0 = arith.constant 0 : i32
    %c0_i32_1 = arith.constant 0 : i32
    return %c0_i32, %c0_i32_0 : i32, i32
  }
  func.func @transform_12(%arg0: i32, %arg1: i32) -> (i32, i32) {
    %c0_i32 = arith.constant 0 : i32
    %c0_i32_0 = arith.constant 0 : i32
    %c0_i32_1 = arith.constant 0 : i32
    return %c0_i32, %c0_i32_0 : i32, i32
  }
  func.func @transform_13(%arg0: i32, %arg1: i32) -> (i32, i32) {
    %c0_i32 = arith.constant 0 : i32
    %c0_i32_0 = arith.constant 0 : i32
    %c0_i32_1 = arith.constant 0 : i32
    return %c0_i32, %c0_i32_0 : i32, i32
  }
  func.func @transform_14(%arg0: i32, %arg1: i32) -> (i32, i32) {
    %c0_i32 = arith.constant 0 : i32
    %c0_i32_0 = arith.constant 0 : i32
    %c0_i32_1 = arith.constant 0 : i32
    return %c0_i32, %c0_i32_0 : i32, i32
  }
  func.func @transform_15(%arg0: i32, %arg1: i32) -> i32 {
    %c0_i32 = arith.constant 0 : i32
    %c0_i32_0 = arith.constant 0 : i32
    return %c0_i32 : i32
  }
  func.func @transform_16(%arg0: i32, %arg1: i32) -> (i32, i32, i32) {
    %c0_i32 = arith.constant 0 : i32
    %c0_i32_0 = arith.constant 0 : i32
    %c0_i32_1 = arith.constant 0 : i32
    return %arg0, %c0_i32, %c0_i32_0 : i32, i32, i32
  }
}

</mosaic_0001>

<llo_original>
// kernel: discriminator_model_forward.1
$region0: #{discriminator_model_forward.1}
  #allocation0 [shape = 'u32[]', space=smem, size = 0x4, offset = 0x4, fixed_abs, tag = 'smem constant byte address 0x4 - core index']
  #allocation1 [shape = 'u32[144,128]{1,0:T(1,128)}', space=vmem, size = 0x12000, scoped, tag = 'internal scratch']
  #allocation2 [shape = 'f32[8,128]{1,0:T(8,128)}', space=vmem, size = 0x1000, scoped, tag = 'scratch operand']
  #allocation3 [shape = 'f32[8,128]{1,0:T(8,128)}', space=vmem, size = 0x1000, scoped, tag = 'scratch operand']
  #allocation4 [shape = 'f32[1]{0:T(128)S(6)}', space=smem, size = 0x200, scoped, tag = 'scoped memory for discriminator_model_forward.1']
  %s0 = inlined_call_operand.vmem [shape: f32[2,32,128], index: 0, kind: input, shape index: {}]
  %s1 = inlined_call_operand.vmem [shape: f32[2,1,128], index: 1, kind: input, shape index: {}]
  %s2 = inlined_call_operand.vmem [shape: f32[128,128], index: 2, kind: input, shape index: {}]
  %s3 = inlined_call_operand.vmem [shape: bf16[128,128], index: 3, kind: input, shape index: {}]
  %s4 = inlined_call_operand.vmem [shape: f32[128,128], index: 4, kind: input, shape index: {}]
  %s5 = inlined_call_operand.vmem [shape: f32[1,128], index: 5, kind: input, shape index: {}]
  %s6 = inlined_call_operand.vmem [shape: f32[1,128], index: 6, kind: input, shape index: {}]
  %s7 = inlined_call_operand.vmem [shape: f32[128,128], index: 7, kind: input, shape index: {}]
  %s8 = inlined_call_operand.vmem [shape: f32[1,128], index: 8, kind: input, shape index: {}]
  %s9 = inlined_call_operand.vmem [shape: f32[128,128], index: 9, kind: input, shape index: {}]
  %s10 = inlined_call_operand.vmem [shape: f32[1,128], index: 10, kind: input, shape index: {}]
  %s11 = inlined_call_operand.vmem [shape: f32[128,128], index: 11, kind: input, shape index: {}]
  %s12 = inlined_call_operand.vmem [shape: f32[1,128], index: 12, kind: input, shape index: {}]
  %s13 = inlined_call_operand.vmem [shape: f32[128,128], index: 13, kind: input, shape index: {}]
  %s14 = inlined_call_operand.vmem [shape: f32[1,128], index: 14, kind: input, shape index: {}]
  %s15 = inlined_call_operand.<no memory space> [shape: f32[1], index: 15, kind: input, shape index: {}]
  %s16 = inlined_call_operand.vmem [shape: f32[2,8,128], index: 16, kind: output, shape index: {}]
  %s17 = sld [smem:[#allocation0]]
  $region105: #{discriminator_model_forward.1} parent=0
    _
  %s19 = ssub.s32 1, %s17
  %s20 = scalar_select 0, %s19, %s17
  %21 = sst [smem:[#allocation4]] %s15
  loop: start=0, step=1, limit=4
  $region2: #{discriminator_model_forward.1} parent=0 // loop_pre_header
    _
  $region3: #{discriminator_model_forward.1} parent=0 // loop_header
    %s23 = sphi 0, %s27
    %p24 = scmp.ge.s32.totalorder %s23, 4
    %s30 = sphi 0, %s42
    %s31 = sphi 0, %s38
    %s32 = sphi 0, %s30
    %s33 = sphi 0, %s31
    %s34 = sphi 0, %s32
    %s35 = sphi 0, %s33
    %s47 = sphi 0, %s49
    %s50 = sphi 0, %s47
    %s51 = sphi 0, %s50
    %s67 = sphi 0, %s51
    %s73 = sphi 0, %s75
    %s76 = sphi 0, %s73
    %s77 = sphi 0, %s76
    %s93 = sphi 0, %s77
    %s97 = sphi 0, %s97
    %s99 = sphi 0, %s97
    %s100 = sphi 0, %s99
    %s114 = sphi 0, %s100
    %s118 = sphi 0, %s118
    %s120 = sphi 0, %s118
    %s121 = sphi 0, %s120
    %s135 = sphi 0, %s121
    %s139 = sphi 0, %s139
    %s141 = sphi 0, %s139
    %s142 = sphi 0, %s141
    %s156 = sphi 0, %s142
    %s160 = sphi 0, %s160
    %s162 = sphi 0, %s160
    %s163 = sphi 0, %s162
    %s177 = sphi 0, %s163
    %s181 = sphi 0, %s181
    %s183 = sphi 0, %s181
    %s184 = sphi 0, %s183
    %s198 = sphi 0, %s184
    %s202 = sphi 0, %s202
    %s204 = sphi 0, %s202
    %s205 = sphi 0, %s204
    %s219 = sphi 0, %s205
    %s223 = sphi 0, %s223
    %s225 = sphi 0, %s223
    %s226 = sphi 0, %s225
    %s240 = sphi 0, %s226
    %s244 = sphi 0, %s244
    %s246 = sphi 0, %s244
    %s247 = sphi 0, %s246
    %s261 = sphi 0, %s247
    %s265 = sphi 0, %s265
    %s267 = sphi 0, %s265
    %s268 = sphi 0, %s267
    %s282 = sphi 0, %s268
    %s286 = sphi 0, %s286
    %s288 = sphi 0, %s286
    %s289 = sphi 0, %s288
    %s303 = sphi 0, %s289
    %s307 = sphi 0, %s307
    %s309 = sphi 0, %s307
    %s310 = sphi 0, %s309
    %s324 = sphi 0, %s310
    %s328 = sphi 0, %s328
    %s330 = sphi 0, %s328
    %s331 = sphi 0, %s330
    %s345 = sphi 0, %s331
    %s349 = sphi 0, %s349
    %s351 = sphi 0, %s349
    %s352 = sphi 0, %s351
    %s366 = sphi 0, %s352
    %s370 = sphi 0, %s370
    %s372 = sphi 0, %s370
    %s373 = sphi 0, %s372
    %s387 = sphi 0, %s373
    %s393 = sphi 0, %s395
    %s396 = sphi 0, %s393
    %s397 = sphi 0, %s396
    %s413 = sphi 0, %s397
  $region4: #{discriminator_model_forward.1} parent=0 // loop_header_branch
    %26 = sbr.rel (%p24) target = $region8
  $region5: #{discriminator_model_forward.1} parent=0 // loop_body
    %s28 = ssub.s32 %s23, 1
    %s29 = ssub.s32 %s23, 2
    %s36 = sadd.s32 1, %s31
    %p37 = scmp.ge.s32.totalorder %s36, 1
    %s38 = scalar_select %p37, 0, %s36
    %s39 = sadd.s32 1, %s30
    %s40 = scalar_select %p37, %s39, %s30
    %p41 = scmp.ge.s32.totalorder %s40, 2
    %s42 = scalar_select %p41, 0, %s40
    %s43 = ssub.s32 %s30, %s42
    %s44 = ssub.s32 %s31, %s38
    %s45 = sor.u32 %s43, %s44
    %p46 = scmp.eq.s32.totalorder %s45, 0
    %s48 = sadd.s32 %s47, 1
    %s49 = scalar_select %p46, %s47, %s48
    %p52 = pneg %p46
    %p53 = scmp.eq.s32.totalorder %s23, 1
    %p54 = por %p52, %p53
    %p55 = scmp.ne.s32.totalorder %s47, %s50
    %p56 = scmp.eq.s32.totalorder %s23, 0
    %p57 = por %p55, %p56
    %p58 = scmp.ne.s32.totalorder %s47, %s50
    %p59 = scmp.eq.s32.totalorder %s28, 1
    %p60 = por %p58, %p59
    %p61 = scmp.ne.s32.totalorder %s50, %s51
    %p62 = scmp.eq.s32.totalorder %s28, 0
    %p63 = por %p61, %p62
    %p64 = scmp.ne.s32.totalorder %s50, %s51
    %p65 = scmp.eq.s32.totalorder %s29, 1
    %p66 = por %p64, %p65
    %p68 = scmp.ne.s32.totalorder %s51, %s67
    %p69 = scmp.eq.s32.totalorder %s29, 0
    %p70 = por %p68, %p69
    %s71 = ssub.s32 %s30, %s42
    %p72 = scmp.eq.s32.totalorder %s71, 0
    %s74 = sadd.s32 %s73, 1
    %s75 = scalar_select %p72, %s73, %s74
    %p78 = pneg %p72
    %p79 = scmp.eq.s32.totalorder %s23, 1
    %p80 = por %p78, %p79
    %p81 = scmp.ne.s32.totalorder %s73, %s76
    %p82 = scmp.eq.s32.totalorder %s23, 0
    %p83 = por %p81, %p82
    %p84 = scmp.ne.s32.totalorder %s73, %s76
    %p85 = scmp.eq.s32.totalorder %s28, 1
    %p86 = por %p84, %p85
    %p87 = scmp.ne.s32.totalorder %s76, %s77
    %p88 = scmp.eq.s32.totalorder %s28, 0
    %p89 = por %p87, %p88
    %p90 = scmp.ne.s32.totalorder %s76, %s77
    %p91 = scmp.eq.s32.totalorder %s29, 1
    %p92 = por %p90, %p91
    %p94 = scmp.ne.s32.totalorder %s77, %s93
    %p95 = scmp.eq.s32.totalorder %s29, 0
    %p96 = por %p94, %p95
    %s98 = sadd.s32 %s97, 1
    %p101 = scmp.eq.s32.totalorder %s23, 1
    %p102 = scmp.ne.s32.totalorder %s97, %s99
    %p103 = scmp.eq.s32.totalorder %s23, 0
    %p104 = por %p102, %p103
    %p105 = scmp.ne.s32.totalorder %s97, %s99
    %p106 = scmp.eq.s32.totalorder %s28, 1
    %p107 = por %p105, %p106
    %p108 = scmp.ne.s32.totalorder %s99, %s100
    %p109 = scmp.eq.s32.totalorder %s28, 0
    %p110 = por %p108, %p109
    %p111 = scmp.ne.s32.totalorder %s99, %s100
    %p112 = scmp.eq.s32.totalorder %s29, 1
    %p113 = por %p111, %p112
    %p115 = scmp.ne.s32.totalorder %s100, %s114
    %p116 = scmp.eq.s32.totalorder %s29, 0
    %p117 = por %p115, %p116
    %s119 = sadd.s32 %s118, 1
    %p122 = scmp.eq.s32.totalorder %s23, 1
    %p123 = scmp.ne.s32.totalorder %s118, %s120
    %p124 = scmp.eq.s32.totalorder %s23, 0
    %p125 = por %p123, %p124
    %p126 = scmp.ne.s32.totalorder %s118, %s120
    %p127 = scmp.eq.s32.totalorder %s28, 1
    %p128 = por %p126, %p127
    %p129 = scmp.ne.s32.totalorder %s120, %s121
    %p130 = scmp.eq.s32.totalorder %s28, 0
    %p131 = por %p129, %p130
    %p132 = scmp.ne.s32.totalorder %s120, %s121
    %p133 = scmp.eq.s32.totalorder %s29, 1
    %p134 = por %p132, %p133
    %p136 = scmp.ne.s32.totalorder %s121, %s135
    %p137 = scmp.eq.s32.totalorder %s29, 0
    %p138 = por %p136, %p137
    %s140 = sadd.s32 %s139, 1
    %p143 = scmp.eq.s32.totalorder %s23, 1
    %p144 = scmp.ne.s32.totalorder %s139, %s141
    %p145 = scmp.eq.s32.totalorder %s23, 0
    %p146 = por %p144, %p145
    %p147 = scmp.ne.s32.totalorder %s139, %s141
    %p148 = scmp.eq.s32.totalorder %s28, 1
    %p149 = por %p147, %p148
    %p150 = scmp.ne.s32.totalorder %s141, %s142
    %p151 = scmp.eq.s32.totalorder %s28, 0
    %p152 = por %p150, %p151
    %p153 = scmp.ne.s32.totalorder %s141, %s142
    %p154 = scmp.eq.s32.totalorder %s29, 1
    %p155 = por %p153, %p154
    %p157 = scmp.ne.s32.totalorder %s142, %s156
    %p158 = scmp.eq.s32.totalorder %s29, 0
    %p159 = por %p157, %p158
    %s161 = sadd.s32 %s160, 1
    %p164 = scmp.eq.s32.totalorder %s23, 1
    %p165 = scmp.ne.s32.totalorder %s160, %s162
    %p166 = scmp.eq.s32.totalorder %s23, 0
    %p167 = por %p165, %p166
    %p168 = scmp.ne.s32.totalorder %s160, %s162
    %p169 = scmp.eq.s32.totalorder %s28, 1
    %p170 = por %p168, %p169
    %p171 = scmp.ne.s32.totalorder %s162, %s163
    %p172 = scmp.eq.s32.totalorder %s28, 0
    %p173 = por %p171, %p172
    %p174 = scmp.ne.s32.totalorder %s162, %s163
    %p175 = scmp.eq.s32.totalorder %s29, 1
    %p176 = por %p174, %p175
    %p178 = scmp.ne.s32.totalorder %s163, %s177
    %p179 = scmp.eq.s32.totalorder %s29, 0
    %p180 = por %p178, %p179
    %s182 = sadd.s32 %s181, 1
    %p185 = scmp.eq.s32.totalorder %s23, 1
    %p186 = scmp.ne.s32.totalorder %s181, %s183
    %p187 = scmp.eq.s32.totalorder %s23, 0
    %p188 = por %p186, %p187
    %p189 = scmp.ne.s32.totalorder %s181, %s183
    %p190 = scmp.eq.s32.totalorder %s28, 1
    %p191 = por %p189, %p190
    %p192 = scmp.ne.s32.totalorder %s183, %s184
    %p193 = scmp.eq.s32.totalorder %s28, 0
    %p194 = por %p192, %p193
    %p195 = scmp.ne.s32.totalorder %s183, %s184
    %p196 = scmp.eq.s32.totalorder %s29, 1
    %p197 = por %p195, %p196
    %p199 = scmp.ne.s32.totalorder %s184, %s198
    %p200 = scmp.eq.s32.totalorder %s29, 0
    %p201 = por %p199, %p200
    %s203 = sadd.s32 %s202, 1
    %p206 = scmp.eq.s32.totalorder %s23, 1
    %p207 = scmp.ne.s32.totalorder %s202, %s204
    %p208 = scmp.eq.s32.totalorder %s23, 0
    %p209 = por %p207, %p208
    %p210 = scmp.ne.s32.totalorder %s202, %s204
    %p211 = scmp.eq.s32.totalorder %s28, 1
    %p212 = por %p210, %p211
    %p213 = scmp.ne.s32.totalorder %s204, %s205
    %p214 = scmp.eq.s32.totalorder %s28, 0
    %p215 = por %p213, %p214
    %p216 = scmp.ne.s32.totalorder %s204, %s205
    %p217 = scmp.eq.s32.totalorder %s29, 1
    %p218 = por %p216, %p217
    %p220 = scmp.ne.s32.totalorder %s205, %s219
    %p221 = scmp.eq.s32.totalorder %s29, 0
    %p222 = por %p220, %p221
    %s224 = sadd.s32 %s223, 1
    %p227 = scmp.eq.s32.totalorder %s23, 1
    %p228 = scmp.ne.s32.totalorder %s223, %s225
    %p229 = scmp.eq.s32.totalorder %s23, 0
    %p230 = por %p228, %p229
    %p231 = scmp.ne.s32.totalorder %s223, %s225
    %p232 = scmp.eq.s32.totalorder %s28, 1
    %p233 = por %p231, %p232
    %p234 = scmp.ne.s32.totalorder %s225, %s226
    %p235 = scmp.eq.s32.totalorder %s28, 0
    %p236 = por %p234, %p235
    %p237 = scmp.ne.s32.totalorder %s225, %s226
    %p238 = scmp.eq.s32.totalorder %s29, 1
    %p239 = por %p237, %p238
    %p241 = scmp.ne.s32.totalorder %s226, %s240
    %p242 = scmp.eq.s32.totalorder %s29, 0
    %p243 = por %p241, %p242
    %s245 = sadd.s32 %s244, 1
    %p248 = scmp.eq.s32.totalorder %s23, 1
    %p249 = scmp.ne.s32.totalorder %s244, %s246
    %p250 = scmp.eq.s32.totalorder %s23, 0
    %p251 = por %p249, %p250
    %p252 = scmp.ne.s32.totalorder %s244, %s246
    %p253 = scmp.eq.s32.totalorder %s28, 1
    %p254 = por %p252, %p253
    %p255 = scmp.ne.s32.totalorder %s246, %s247
    %p256 = scmp.eq.s32.totalorder %s28, 0
    %p257 = por %p255, %p256
    %p258 = scmp.ne.s32.totalorder %s246, %s247
    %p259 = scmp.eq.s32.totalorder %s29, 1
    %p260 = por %p258, %p259
    %p262 = scmp.ne.s32.totalorder %s247, %s261
    %p263 = scmp.eq.s32.totalorder %s29, 0
    %p264 = por %p262, %p263
    %s266 = sadd.s32 %s265, 1
    %p269 = scmp.eq.s32.totalorder %s23, 1
    %p270 = scmp.ne.s32.totalorder %s265, %s267
    %p271 = scmp.eq.s32.totalorder %s23, 0
    %p272 = por %p270, %p271
    %p273 = scmp.ne.s32.totalorder %s265, %s267
    %p274 = scmp.eq.s32.totalorder %s28, 1
    %p275 = por %p273, %p274
    %p276 = scmp.ne.s32.totalorder %s267, %s268
    %p277 = scmp.eq.s32.totalorder %s28, 0
    %p278 = por %p276, %p277
    %p279 = scmp.ne.s32.totalorder %s267, %s268
    %p280 = scmp.eq.s32.totalorder %s29, 1
    %p281 = por %p279, %p280
    %p283 = scmp.ne.s32.totalorder %s268, %s282
    %p284 = scmp.eq.s32.totalorder %s29, 0
    %p285 = por %p283, %p284
    %s287 = sadd.s32 %s286, 1
    %p290 = scmp.eq.s32.totalorder %s23, 1
    %p291 = scmp.ne.s32.totalorder %s286, %s288
    %p292 = scmp.eq.s32.totalorder %s23, 0
    %p293 = por %p291, %p292
    %p294 = scmp.ne.s32.totalorder %s286, %s288
    %p295 = scmp.eq.s32.totalorder %s28, 1
    %p296 = por %p294, %p295
    %p297 = scmp.ne.s32.totalorder %s288, %s289
    %p298 = scmp.eq.s32.totalorder %s28, 0
    %p299 = por %p297, %p298
    %p300 = scmp.ne.s32.totalorder %s288, %s289
    %p301 = scmp.eq.s32.totalorder %s29, 1
    %p302 = por %p300, %p301
    %p304 = scmp.ne.s32.totalorder %s289, %s303
    %p305 = scmp.eq.s32.totalorder %s29, 0
    %p306 = por %p304, %p305
    %s308 = sadd.s32 %s307, 1
    %p311 = scmp.eq.s32.totalorder %s23, 1
    %p312 = scmp.ne.s32.totalorder %s307, %s309
    %p313 = scmp.eq.s32.totalorder %s23, 0
    %p314 = por %p312, %p313
    %p315 = scmp.ne.s32.totalorder %s307, %s309
    %p316 = scmp.eq.s32.totalorder %s28, 1
    %p317 = por %p315, %p316
    %p318 = scmp.ne.s32.totalorder %s309, %s310
    %p319 = scmp.eq.s32.totalorder %s28, 0
    %p320 = por %p318, %p319
    %p321 = scmp.ne.s32.totalorder %s309, %s310
    %p322 = scmp.eq.s32.totalorder %s29, 1
    %p323 = por %p321, %p322
    %p325 = scmp.ne.s32.totalorder %s310, %s324
    %p326 = scmp.eq.s32.totalorder %s29, 0
    %p327 = por %p325, %p326
    %s329 = sadd.s32 %s328, 1
    %p332 = scmp.eq.s32.totalorder %s23, 1
    %p333 = scmp.ne.s32.totalorder %s328, %s330
    %p334 = scmp.eq.s32.totalorder %s23, 0
    %p335 = por %p333, %p334
    %p336 = scmp.ne.s32.totalorder %s328, %s330
    %p337 = scmp.eq.s32.totalorder %s28, 1
    %p338 = por %p336, %p337
    %p339 = scmp.ne.s32.totalorder %s330, %s331
    %p340 = scmp.eq.s32.totalorder %s28, 0
    %p341 = por %p339, %p340
    %p342 = scmp.ne.s32.totalorder %s330, %s331
    %p343 = scmp.eq.s32.totalorder %s29, 1
    %p344 = por %p342, %p343
    %p346 = scmp.ne.s32.totalorder %s331, %s345
    %p347 = scmp.eq.s32.totalorder %s29, 0
    %p348 = por %p346, %p347
    %s350 = sadd.s32 %s349, 1
    %p353 = scmp.eq.s32.totalorder %s23, 1
    %p354 = scmp.ne.s32.totalorder %s349, %s351
    %p355 = scmp.eq.s32.totalorder %s23, 0
    %p356 = por %p354, %p355
    %p357 = scmp.ne.s32.totalorder %s349, %s351
    %p358 = scmp.eq.s32.totalorder %s28, 1
    %p359 = por %p357, %p358
    %p360 = scmp.ne.s32.totalorder %s351, %s352
    %p361 = scmp.eq.s32.totalorder %s28, 0
    %p362 = por %p360, %p361
    %p363 = scmp.ne.s32.totalorder %s351, %s352
    %p364 = scmp.eq.s32.totalorder %s29, 1
    %p365 = por %p363, %p364
    %p367 = scmp.ne.s32.totalorder %s352, %s366
    %p368 = scmp.eq.s32.totalorder %s29, 0
    %p369 = por %p367, %p368
    %s371 = sadd.s32 %s370, 1
    %p374 = scmp.eq.s32.totalorder %s23, 1
    %p375 = scmp.ne.s32.totalorder %s370, %s372
    %p376 = scmp.eq.s32.totalorder %s23, 0
    %p377 = por %p375, %p376
    %p378 = scmp.ne.s32.totalorder %s370, %s372
    %p379 = scmp.eq.s32.totalorder %s28, 1
    %p380 = por %p378, %p379
    %p381 = scmp.ne.s32.totalorder %s372, %s373
    %p382 = scmp.eq.s32.totalorder %s28, 0
    %p383 = por %p381, %p382
    %p384 = scmp.ne.s32.totalorder %s372, %s373
    %p385 = scmp.eq.s32.totalorder %s29, 1
    %p386 = por %p384, %p385
    %p388 = scmp.ne.s32.totalorder %s373, %s387
    %p389 = scmp.eq.s32.totalorder %s29, 0
    %p390 = por %p388, %p389
    %s391 = ssub.s32 %s30, %s42
    %p392 = scmp.eq.s32.totalorder %s391, 0
    %s394 = sadd.s32 %s393, 1
    %s395 = scalar_select %p392, %s393, %s394
    %p398 = pneg %p392
    %p399 = scmp.eq.s32.totalorder %s23, 1
    %p400 = por %p398, %p399
    %p401 = scmp.ne.s32.totalorder %s393, %s396
    %p402 = scmp.eq.s32.totalorder %s23, 0
    %p403 = por %p401, %p402
    %p404 = scmp.ne.s32.totalorder %s393, %s396
    %p405 = scmp.eq.s32.totalorder %s28, 1
    %p406 = por %p404, %p405
    %p407 = scmp.ne.s32.totalorder %s396, %s397
    %p408 = scmp.eq.s32.totalorder %s28, 0
    %p409 = por %p407, %p408
    %p410 = scmp.ne.s32.totalorder %s396, %s397
    %p411 = scmp.eq.s32.totalorder %s29, 1
    %p412 = por %p410, %p411
    %p414 = scmp.ne.s32.totalorder %s397, %s413
    %p415 = scmp.eq.s32.totalorder %s29, 0
    %p416 = por %p414, %p415
    %p417 = scmp.le.s32.totalorder 1, %s23
    %p418 = scmp.lt.s32.totalorder %s23, 3
    %p419 = pnand %p417, %p418
    %p420 = pneg %p419
    // Predicated region
    $region9: #{discriminator_model_forward.1} parent=5 // pred_check
      _
    $region10: #{discriminator_model_forward.1} parent=5 // pred_check_branch
      %422 = sbr.rel (%p419) target = $region12
    $region11: #{discriminator_model_forward.1} parent=5 // pred_region
      %s423 = ssub.s32 %s23, 1
      // Predicated region
      $region13: #{discriminator_model_forward.1} parent=11 // pred_check
        %p424 = pneg %p110
      $region14: #{discriminator_model_forward.1} parent=11 // pred_check_branch
        %426 = sbr.rel (%p424) target = $region16
      $region15: #{discriminator_model_forward.1} parent=11 // pred_region
        _
      $region16: #{discriminator_model_forward.1} parent=11 // pred_fallthru
        _
      // Predicated region
      $region17: #{discriminator_model_forward.1} parent=11 // pred_check
        %p427 = pneg %p131
      $region18: #{discriminator_model_forward.1} parent=11 // pred_check_branch
        %429 = sbr.rel (%p427) target = $region20
      $region19: #{discriminator_model_forward.1} parent=11 // pred_region
        _
      $region20: #{discriminator_model_forward.1} parent=11 // pred_fallthru
        _
      // Predicated region
      $region21: #{discriminator_model_forward.1} parent=11 // pred_check
        %p430 = pneg %p152
      $region22: #{discriminator_model_forward.1} parent=11 // pred_check_branch
        %432 = sbr.rel (%p430) target = $region24
      $region23: #{discriminator_model_forward.1} parent=11 // pred_region
        _
      $region24: #{discriminator_model_forward.1} parent=11 // pred_fallthru
        _
      // Predicated region
      $region25: #{discriminator_model_forward.1} parent=11 // pred_check
        %p433 = pneg %p173
      $region26: #{discriminator_model_forward.1} parent=11 // pred_check_branch
        %435 = sbr.rel (%p433) target = $region28
      $region27: #{discriminator_model_forward.1} parent=11 // pred_region
        _
      $region28: #{discriminator_model_forward.1} parent=11 // pred_fallthru
        _
      // Predicated region
      $region29: #{discriminator_model_forward.1} parent=11 // pred_check
        %p436 = pneg %p194
      $region30: #{discriminator_model_forward.1} parent=11 // pred_check_branch
        %438 = sbr.rel (%p436) target = $region32
      $region31: #{discriminator_model_forward.1} parent=11 // pred_region
        _
      $region32: #{discriminator_model_forward.1} parent=11 // pred_fallthru
        _
      // Predicated region
      $region33: #{discriminator_model_forward.1} parent=11 // pred_check
        %p439 = pneg %p215
      $region34: #{discriminator_model_forward.1} parent=11 // pred_check_branch
        %441 = sbr.rel (%p439) target = $region36
      $region35: #{discriminator_model_forward.1} parent=11 // pred_region
        _
      $region36: #{discriminator_model_forward.1} parent=11 // pred_fallthru
        _
      // Predicated region
      $region37: #{discriminator_model_forward.1} parent=11 // pred_check
        %p442 = pneg %p236
      $region38: #{discriminator_model_forward.1} parent=11 // pred_check_branch
        %444 = sbr.rel (%p442) target = $region40
      $region39: #{discriminator_model_forward.1} parent=11 // pred_region
        _
      $region40: #{discriminator_model_forward.1} parent=11 // pred_fallthru
        _
      // Predicated region
      $region41: #{discriminator_model_forward.1} parent=11 // pred_check
        %p445 = pneg %p257
      $region42: #{discriminator_model_forward.1} parent=11 // pred_check_branch
        %447 = sbr.rel (%p445) target = $region44
      $region43: #{discriminator_model_forward.1} parent=11 // pred_region
        _
      $region44: #{discriminator_model_forward.1} parent=11 // pred_fallthru
        _
      // Predicated region
      $region45: #{discriminator_model_forward.1} parent=11 // pred_check
        %p448 = pneg %p278
      $region46: #{discriminator_model_forward.1} parent=11 // pred_check_branch
        %450 = sbr.rel (%p448) target = $region48
      $region47: #{discriminator_model_forward.1} parent=11 // pred_region
        _
      $region48: #{discriminator_model_forward.1} parent=11 // pred_fallthru
        _
      // Predicated region
      $region49: #{discriminator_model_forward.1} parent=11 // pred_check
        %p451 = pneg %p299
      $region50: #{discriminator_model_forward.1} parent=11 // pred_check_branch
        %453 = sbr.rel (%p451) target = $region52
      $region51: #{discriminator_model_forward.1} parent=11 // pred_region
        _
      $region52: #{discriminator_model_forward.1} parent=11 // pred_fallthru
        _
      // Predicated region
      $region53: #{discriminator_model_forward.1} parent=11 // pred_check
        %p454 = pneg %p320
      $region54: #{discriminator_model_forward.1} parent=11 // pred_check_branch
        %456 = sbr.rel (%p454) target = $region56
      $region55: #{discriminator_model_forward.1} parent=11 // pred_region
        _
      $region56: #{discriminator_model_forward.1} parent=11 // pred_fallthru
        _
      // Predicated region
      $region57: #{discriminator_model_forward.1} parent=11 // pred_check
        %p457 = pneg %p341
      $region58: #{discriminator_model_forward.1} parent=11 // pred_check_branch
        %459 = sbr.rel (%p457) target = $region60
      $region59: #{discriminator_model_forward.1} parent=11 // pred_region
        _
      $region60: #{discriminator_model_forward.1} parent=11 // pred_fallthru
        _
      // Predicated region
      $region61: #{discriminator_model_forward.1} parent=11 // pred_check
        %p460 = pneg %p362
      $region62: #{discriminator_model_forward.1} parent=11 // pred_check_branch
        %462 = sbr.rel (%p460) target = $region64
      $region63: #{discriminator_model_forward.1} parent=11 // pred_region
        _
      $region64: #{discriminator_model_forward.1} parent=11 // pred_fallthru
        _
      // Predicated region
      $region65: #{discriminator_model_forward.1} parent=11 // pred_check
        %p463 = pneg %p383
      $region66: #{discriminator_model_forward.1} parent=11 // pred_check_branch
        %465 = sbr.rel (%p463) target = $region68
      $region67: #{discriminator_model_forward.1} parent=11 // pred_region
        _
      $region68: #{discriminator_model_forward.1} parent=11 // pred_fallthru
        _
    $region12: #{discriminator_model_forward.1} parent=5 // pred_fallthru
      _
    %p466 = scmp.lt.s32.totalorder %s23, 2
    // Predicated region
    $region69: #{discriminator_model_forward.1} parent=5 // pred_check
      %p467 = pneg %p466
    $region70: #{discriminator_model_forward.1} parent=5 // pred_check_branch
      %469 = sbr.rel (%p467) target = $region72
    $region71: #{discriminator_model_forward.1} parent=5 // pred_region
      // Predicated region
      $region73: #{discriminator_model_forward.1} parent=71 // pred_check
        %p470 = pneg %p57
      $region74: #{discriminator_model_forward.1} parent=71 // pred_check_branch
        %472 = sbr.rel (%p470) target = $region76
      $region75: #{discriminator_model_forward.1} parent=71 // pred_region
        %s473 = smul.u32 4, %s31
        %p474 = scmp.lt.s32.totalorder %s30, 1
        %s475 = scalar_select %p474, %s30, 1
        %p476 = scmp.lt.s32.totalorder %s473, 3
        %s477 = scalar_select %p476, %s473, 3
        %s478 = smul.addr %s475, 4
        %s479 = sadd.s32 %s477, %s478
        %s480 = smul.addr %s479, 8
        %s481 = scalar_lea.vmem %s0, %s480
        %s482 = smul.u32 4, %s31
      $region76: #{discriminator_model_forward.1} parent=71 // pred_fallthru
        _
      // Predicated region
      $region77: #{discriminator_model_forward.1} parent=71 // pred_check
        %p483 = pneg %p83
      $region78: #{discriminator_model_forward.1} parent=71 // pred_check_branch
        %485 = sbr.rel (%p483) target = $region80
      $region79: #{discriminator_model_forward.1} parent=71 // pred_region
        %p486 = scmp.lt.s32.totalorder %s30, 1
        %s487 = scalar_select %p486, %s30, 1
        %s488 = scalar_lea.vmem %s1, %s487
      $region80: #{discriminator_model_forward.1} parent=71 // pred_fallthru
        _
    $region72: #{discriminator_model_forward.1} parent=5 // pred_fallthru
      _
    %p489 = scmp.le.s32.totalorder 1, %s23
    %p490 = scmp.lt.s32.totalorder %s23, 3
    %p491 = pnand %p489, %p490
    %p492 = pneg %p491
    // Predicated region
    $region81: #{discriminator_model_forward.1} parent=5 // pred_check
      _
    $region82: #{discriminator_model_forward.1} parent=5 // pred_check_branch
      %494 = sbr.rel (%p491) target = $region84
    $region83: #{discriminator_model_forward.1} parent=5 // pred_region
      %s495 = ssub.s32 %s23, 1
      %s496 = smul.u32 4, %s33
      %p497 = scmp.lt.s32.totalorder %s32, 1
      %s498 = scalar_select %p497, %s32, 1
      %p499 = scmp.lt.s32.totalorder %s496, 3
      %s500 = scalar_select %p499, %s496, 3
      %s501 = smul.addr %s498, 4
      %s502 = sadd.s32 %s500, %s501
      %s503 = smul.addr %s502, 8
      %s504 = scalar_lea.vmem %s0, %s503
      %p505 = pneg %p63
      %p506 = pneg %p60
      %p507 = scmp.lt.s32.totalorder %s32, 1
      %s508 = scalar_select %p507, %s32, 1
      %s509 = scalar_lea.vmem %s1, %s508
      %p510 = pneg %p89
      %p511 = pneg %p86
      %p512 = pneg %p110
      %p513 = pneg %p107
      %p514 = pneg %p131
      %p515 = pneg %p128
      %p516 = pneg %p152
      %p517 = pneg %p149
      %p518 = pneg %p173
      %p519 = pneg %p170
      %p520 = pneg %p194
      %p521 = pneg %p191
      %p522 = pneg %p215
      %p523 = pneg %p212
      %p524 = pneg %p236
      %p525 = pneg %p233
      %p526 = pneg %p257
      %p527 = pneg %p254
      %p528 = pneg %p278
      %p529 = pneg %p275
      %p530 = pneg %p299
      %p531 = pneg %p296
      %p532 = pneg %p320
      %p533 = pneg %p317
      %p534 = pneg %p341
      %p535 = pneg %p338
      %p536 = pneg %p362
      %p537 = pneg %p359
      %p538 = pneg %p383
      %p539 = pneg %p380
      %p540 = pneg %p409
      %p541 = pneg %p406
      %p542 = scmp.lt.s32.totalorder %s32, 1
      %s543 = scalar_select %p542, %s32, 1
      %s544 = smul.addr %s543, 8
      %s545 = scalar_lea.vmem %s16, %s544
      %s546 = smul.u32 4, %s33
      %p547 = scmp.lt.s32.totalorder %s32, 1
      %s548 = scalar_select %p547, %s32, 1
      %p549 = scmp.lt.s32.totalorder %s546, 3
      %s550 = scalar_select %p549, %s546, 3
      %s551 = smul.addr %s548, 4
      %s552 = sadd.s32 %s550, %s551
      %s553 = smul.addr %s552, 8
      %s554 = scalar_lea.vmem %s0, %s553
      %s555 = smul.u32 4, %s33
      %p556 = scmp.lt.s32.totalorder %s32, 1
      %s557 = scalar_select %p556, %s32, 1
      %s558 = scalar_lea.vmem %s1, %s557
      %p559 = scmp.lt.s32.totalorder %s32, 1
      %s560 = scalar_select %p559, %s32, 1
      %s561 = smul.addr %s560, 8
      %s562 = scalar_lea.vmem %s16, %s561
      %p564 = scmp.eq.s32.totalorder %s33, 0
      // Predicated region
      $region85: #{discriminator_model_forward.1} parent=83 // pred_check
        %p565 = pneg %p564
      $region86: #{discriminator_model_forward.1} parent=83 // pred_check_branch
        %567 = sbr.rel (%p565) target = $region88
      $region87: #{discriminator_model_forward.1} parent=83 // pred_region
        %568 = vst [vmem:[#allocation2] sm:$0xff] 0.0
        %v569 = vld [vmem:[%s558] sm:$0x1]
        %v570 = vld [vmem:[%s7] sm:$0xff]
        %v571 = vld [vmem:[%s7 + $0x8] sm:$0xff]
        %v572 = vld [vmem:[%s7 + $0x10] sm:$0xff]
        %v573 = vld [vmem:[%s7 + $0x18] sm:$0xff]
        %v574 = vld [vmem:[%s7 + $0x20] sm:$0xff]
        %v575 = vld [vmem:[%s7 + $0x28] sm:$0xff]
        %v576 = vld [vmem:[%s7 + $0x30] sm:$0xff]
        %v577 = vld [vmem:[%s7 + $0x38] sm:$0xff]
        %v578 = vld [vmem:[%s7 + $0x40] sm:$0xff]
        %v579 = vld [vmem:[%s7 + $0x48] sm:$0xff]
        %v580 = vld [vmem:[%s7 + $0x50] sm:$0xff]
        %v581 = vld [vmem:[%s7 + $0x58] sm:$0xff]
        %v582 = vld [vmem:[%s7 + $0x60] sm:$0xff]
        %v583 = vld [vmem:[%s7 + $0x68] sm:$0xff]
        %v584 = vld [vmem:[%s7 + $0x70] sm:$0xff]
        %v585 = vld [vmem:[%s7 + $0x78] sm:$0xff]
        %v586 = vld [vmem:[%s8] sm:$0x1]
        %587 = vmatprep.subr.mxu0 0.0
        %588 = vmatpush1.msra.mxu0 %v570
        %589 = vmatprep.subr.mxu0 0.0
        %590 = vmatpush1.msra.mxu0 %v571
        %591 = vmatprep.subr.mxu0 0.0
        %592 = vmatpush1.msra.mxu0 %v572
        %593 = vmatprep.subr.mxu0 0.0
        %594 = vmatpush1.msra.mxu0 %v573
        %595 = vmatprep.subr.mxu0 0.0
        %596 = vmatpush1.msra.mxu0 %v574
        %597 = vmatprep.subr.mxu0 0.0
        %598 = vmatpush1.msra.mxu0 %v575
        %599 = vmatprep.subr.mxu0 0.0
        %600 = vmatpush1.msra.mxu0 %v576
        %601 = vmatprep.subr.mxu0 0.0
        %602 = vmatpush1.msra.mxu0 %v577
        %603 = vmatprep.subr.mxu0 0.0
        %604 = vmatpush1.msra.mxu0 %v578
        %605 = vmatprep.subr.mxu0 0.0
        %606 = vmatpush1.msra.mxu0 %v579
        %607 = vmatprep.subr.mxu0 0.0
        %608 = vmatpush1.msra.mxu0 %v580
        %609 = vmatprep.subr.mxu0 0.0
        %610 = vmatpush1.msra.mxu0 %v581
        %611 = vmatprep.subr.mxu0 0.0
        %612 = vmatpush1.msra.mxu0 %v582
        %613 = vmatprep.subr.mxu0 0.0
        %614 = vmatpush1.msra.mxu0 %v583
        %615 = vmatprep.subr.mxu0 0.0
        %616 = vmatpush1.msra.mxu0 %v584
        %617 = vmatprep.subr.mxu0 0.0
        %618 = vmatpush1.msra.mxu0 %v585
        %619 = vmatprep.subr.mxu0 0.0
        %620 = vmatpush1.msra.mxu0 0.0
        %621 = vmatprep.subr.mxu0 0.0
        %622 = vmatpush1.msra.mxu0 0.0
        %623 = vmatprep.subr.mxu0 0.0
        %624 = vmatpush1.msra.mxu0 0.0
        %625 = vmatprep.subr.mxu0 0.0
        %626 = vmatpush1.msra.mxu0 0.0
        %627 = vmatprep.subr.mxu0 0.0
        %628 = vmatpush1.msra.mxu0 0.0
        %629 = vmatprep.subr.mxu0 0.0
        %630 = vmatpush1.msra.mxu0 0.0
        %631 = vmatprep.subr.mxu0 0.0
        %632 = vmatpush1.msra.mxu0 0.0
        %633 = vmatprep.subr.mxu0 0.0
        %634 = vmatpush1.msra.mxu0 0.0
        %635 = vmatprep.subr.mxu0 0.0
        %636 = vmatpush1.msra.mxu0 0.0
        %637 = vmatprep.subr.mxu0 0.0
        %638 = vmatpush1.msra.mxu0 0.0
        %639 = vmatprep.subr.mxu0 0.0
        %640 = vmatpush1.msra.mxu0 0.0
        %641 = vmatprep.subr.mxu0 0.0
        %642 = vmatpush1.msra.mxu0 0.0
        %643 = vmatprep.subr.mxu0 0.0
        %644 = vmatpush1.msra.mxu0 0.0
        %645 = vmatprep.subr.mxu0 0.0
        %646 = vmatpush1.msra.mxu0 0.0
        %647 = vmatprep.subr.mxu0 0.0
        %648 = vmatpush1.msra.mxu0 0.0
        %649 = vmatprep.subr.mxu0 0.0
        %650 = vmatpush1.msra.mxu0 0.0
        %651 = vmatprep.mubr.f32.mxu0 0.0
        %652 = vmatmul.mubr.f32.gmra.mrb[0].mxu0 %v569
        %v653 = vpop.f32.mrb[0].mxu0
        %v654 = vadd.f32 %v586, %v653
        %v655 = vpop.f32.mrb[0].mxu0
        %656 = vdwg.mxu0
        %vm657 = vcmp.gt.f32.partialorder %v654, 0.0
        %v658 = vmul.f32 %v654, 0.2
        %v659 = vsel %vm657, %v654, %v658
        %v660 = vld [vmem:[%s9] sm:$0xff]
        %v661 = vld [vmem:[%s9 + $0x8] sm:$0xff]
        %v662 = vld [vmem:[%s9 + $0x10] sm:$0xff]
        %v663 = vld [vmem:[%s9 + $0x18] sm:$0xff]
        %v664 = vld [vmem:[%s9 + $0x20] sm:$0xff]
        %v665 = vld [vmem:[%s9 + $0x28] sm:$0xff]
        %v666 = vld [vmem:[%s9 + $0x30] sm:$0xff]
        %v667 = vld [vmem:[%s9 + $0x38] sm:$0xff]
        %v668 = vld [vmem:[%s9 + $0x40] sm:$0xff]
        %v669 = vld [vmem:[%s9 + $0x48] sm:$0xff]
        %v670 = vld [vmem:[%s9 + $0x50] sm:$0xff]
        %v671 = vld [vmem:[%s9 + $0x58] sm:$0xff]
        %v672 = vld [vmem:[%s9 + $0x60] sm:$0xff]
        %v673 = vld [vmem:[%s9 + $0x68] sm:$0xff]
        %v674 = vld [vmem:[%s9 + $0x70] sm:$0xff]
        %v675 = vld [vmem:[%s9 + $0x78] sm:$0xff]
        %v676 = vld [vmem:[%s10] sm:$0x1]
        %677 = vmatprep.subr.mxu0 0.0
        %678 = vmatpush1.msra.mxu0 %v660
        %679 = vmatprep.subr.mxu0 0.0
        %680 = vmatpush1.msra.mxu0 %v661
        %681 = vmatprep.subr.mxu0 0.0
        %682 = vmatpush1.msra.mxu0 %v662
        %683 = vmatprep.subr.mxu0 0.0
        %684 = vmatpush1.msra.mxu0 %v663
        %685 = vmatprep.subr.mxu0 0.0
        %686 = vmatpush1.msra.mxu0 %v664
        %687 = vmatprep.subr.mxu0 0.0
        %688 = vmatpush1.msra.mxu0 %v665
        %689 = vmatprep.subr.mxu0 0.0
        %690 = vmatpush1.msra.mxu0 %v666
        %691 = vmatprep.subr.mxu0 0.0
        %692 = vmatpush1.msra.mxu0 %v667
        %693 = vmatprep.subr.mxu0 0.0
        %694 = vmatpush1.msra.mxu0 %v668
        %695 = vmatprep.subr.mxu0 0.0
        %696 = vmatpush1.msra.mxu0 %v669
        %697 = vmatprep.subr.mxu0 0.0
        %698 = vmatpush1.msra.mxu0 %v670
        %699 = vmatprep.subr.mxu0 0.0
        %700 = vmatpush1.msra.mxu0 %v671
        %701 = vmatprep.subr.mxu0 0.0
        %702 = vmatpush1.msra.mxu0 %v672
        %703 = vmatprep.subr.mxu0 0.0
        %704 = vmatpush1.msra.mxu0 %v673
        %705 = vmatprep.subr.mxu0 0.0
        %706 = vmatpush1.msra.mxu0 %v674
        %707 = vmatprep.subr.mxu0 0.0
        %708 = vmatpush1.msra.mxu0 %v675
        %709 = vmatprep.subr.mxu0 0.0
        %710 = vmatpush1.msra.mxu0 0.0
        %711 = vmatprep.subr.mxu0 0.0
        %712 = vmatpush1.msra.mxu0 0.0
        %713 = vmatprep.subr.mxu0 0.0
        %714 = vmatpush1.msra.mxu0 0.0
        %715 = vmatprep.subr.mxu0 0.0
        %716 = vmatpush1.msra.mxu0 0.0
        %717 = vmatprep.subr.mxu0 0.0
        %718 = vmatpush1.msra.mxu0 0.0
        %719 = vmatprep.subr.mxu0 0.0
        %720 = vmatpush1.msra.mxu0 0.0
        %721 = vmatprep.subr.mxu0 0.0
        %722 = vmatpush1.msra.mxu0 0.0
        %723 = vmatprep.subr.mxu0 0.0
        %724 = vmatpush1.msra.mxu0 0.0
        %725 = vmatprep.subr.mxu0 0.0
        %726 = vmatpush1.msra.mxu0 0.0
        %727 = vmatprep.subr.mxu0 0.0
        %728 = vmatpush1.msra.mxu0 0.0
        %729 = vmatprep.subr.mxu0 0.0
        %730 = vmatpush1.msra.mxu0 0.0
        %731 = vmatprep.subr.mxu0 0.0
        %732 = vmatpush1.msra.mxu0 0.0
        %733 = vmatprep.subr.mxu0 0.0
        %734 = vmatpush1.msra.mxu0 0.0
        %735 = vmatprep.subr.mxu0 0.0
        %736 = vmatpush1.msra.mxu0 0.0
        %737 = vmatprep.subr.mxu0 0.0
        %738 = vmatpush1.msra.mxu0 0.0
        %739 = vmatprep.subr.mxu0 0.0
        %740 = vmatpush1.msra.mxu0 0.0
        %741 = vmatprep.mubr.f32.mxu0 0.0
        %742 = vmatmul.mubr.f32.gmra.mrb[0].mxu0 %v659
        %v743 = vpop.f32.mrb[0].mxu0
        %v744 = vadd.f32 %v676, %v743
        %v745 = vpop.f32.mrb[0].mxu0
        %746 = vdwg.mxu0
        %v747 = vld [vmem:[%s11] sm:$0xff]
        %v748 = vld [vmem:[%s11 + $0x8] sm:$0xff]
        %v749 = vld [vmem:[%s11 + $0x10] sm:$0xff]
        %v750 = vld [vmem:[%s11 + $0x18] sm:$0xff]
        %v751 = vld [vmem:[%s11 + $0x20] sm:$0xff]
        %v752 = vld [vmem:[%s11 + $0x28] sm:$0xff]
        %v753 = vld [vmem:[%s11 + $0x30] sm:$0xff]
        %v754 = vld [vmem:[%s11 + $0x38] sm:$0xff]
        %v755 = vld [vmem:[%s11 + $0x40] sm:$0xff]
        %v756 = vld [vmem:[%s11 + $0x48] sm:$0xff]
        %v757 = vld [vmem:[%s11 + $0x50] sm:$0xff]
        %v758 = vld [vmem:[%s11 + $0x58] sm:$0xff]
        %v759 = vld [vmem:[%s11 + $0x60] sm:$0xff]
        %v760 = vld [vmem:[%s11 + $0x68] sm:$0xff]
        %v761 = vld [vmem:[%s11 + $0x70] sm:$0xff]
        %v762 = vld [vmem:[%s11 + $0x78] sm:$0xff]
        %v763 = vld [vmem:[%s12] sm:$0x1]
        %764 = vmatprep.subr.mxu0 0.0
        %765 = vmatpush1.msra.mxu0 %v747
        %766 = vmatprep.subr.mxu0 0.0
        %767 = vmatpush1.msra.mxu0 %v748
        %768 = vmatprep.subr.mxu0 0.0
        %769 = vmatpush1.msra.mxu0 %v749
        %770 = vmatprep.subr.mxu0 0.0
        %771 = vmatpush1.msra.mxu0 %v750
        %772 = vmatprep.subr.mxu0 0.0
        %773 = vmatpush1.msra.mxu0 %v751
        %774 = vmatprep.subr.mxu0 0.0
        %775 = vmatpush1.msra.mxu0 %v752
        %776 = vmatprep.subr.mxu0 0.0
        %777 = vmatpush1.msra.mxu0 %v753
        %778 = vmatprep.subr.mxu0 0.0
        %779 = vmatpush1.msra.mxu0 %v754
        %780 = vmatprep.subr.mxu0 0.0
        %781 = vmatpush1.msra.mxu0 %v755
        %782 = vmatprep.subr.mxu0 0.0
        %783 = vmatpush1.msra.mxu0 %v756
        %784 = vmatprep.subr.mxu0 0.0
        %785 = vmatpush1.msra.mxu0 %v757
        %786 = vmatprep.subr.mxu0 0.0
        %787 = vmatpush1.msra.mxu0 %v758
        %788 = vmatprep.subr.mxu0 0.0
        %789 = vmatpush1.msra.mxu0 %v759
        %790 = vmatprep.subr.mxu0 0.0
        %791 = vmatpush1.msra.mxu0 %v760
        %792 = vmatprep.subr.mxu0 0.0
        %793 = vmatpush1.msra.mxu0 %v761
        %794 = vmatprep.subr.mxu0 0.0
        %795 = vmatpush1.msra.mxu0 %v762
        %796 = vmatprep.subr.mxu0 0.0
        %797 = vmatpush1.msra.mxu0 0.0
        %798 = vmatprep.subr.mxu0 0.0
        %799 = vmatpush1.msra.mxu0 0.0
        %800 = vmatprep.subr.mxu0 0.0
        %801 = vmatpush1.msra.mxu0 0.0
        %802 = vmatprep.subr.mxu0 0.0
        %803 = vmatpush1.msra.mxu0 0.0
        %804 = vmatprep.subr.mxu0 0.0
        %805 = vmatpush1.msra.mxu0 0.0
        %806 = vmatprep.subr.mxu0 0.0
        %807 = vmatpush1.msra.mxu0 0.0
        %808 = vmatprep.subr.mxu0 0.0
        %809 = vmatpush1.msra.mxu0 0.0
        %810 = vmatprep.subr.mxu0 0.0
        %811 = vmatpush1.msra.mxu0 0.0
        %812 = vmatprep.subr.mxu0 0.0
        %813 = vmatpush1.msra.mxu0 0.0
        %814 = vmatprep.subr.mxu0 0.0
        %815 = vmatpush1.msra.mxu0 0.0
        %816 = vmatprep.subr.mxu0 0.0
        %817 = vmatpush1.msra.mxu0 0.0
        %818 = vmatprep.subr.mxu0 0.0
        %819 = vmatpush1.msra.mxu0 0.0
        %820 = vmatprep.subr.mxu0 0.0
        %821 = vmatpush1.msra.mxu0 0.0
        %822 = vmatprep.subr.mxu0 0.0
        %823 = vmatpush1.msra.mxu0 0.0
        %824 = vmatprep.subr.mxu0 0.0
        %825 = vmatpush1.msra.mxu0 0.0
        %826 = vmatprep.subr.mxu0 0.0
        %827 = vmatpush1.msra.mxu0 0.0
        %828 = vmatprep.mubr.f32.mxu0 0.0
        %829 = vmatmul.mubr.f32.gmra.mrb[0].mxu0 %v744
        %v830 = vpop.f32.mrb[0].mxu0
        %v831 = vadd.f32 %v763, %v830
        %v832 = vpop.f32.mrb[0].mxu0
        %833 = vdwg.mxu0
        %834 = vst [vmem:[#allocation3] sm:$0x1] %v831
        %v835 = vld [vmem:[%s13] sm:$0xff]
        %v836 = vld [vmem:[%s13 + $0x8] sm:$0xff]
        %v837 = vld [vmem:[%s13 + $0x10] sm:$0xff]
        %v838 = vld [vmem:[%s13 + $0x18] sm:$0xff]
        %v839 = vld [vmem:[%s13 + $0x20] sm:$0xff]
        %v840 = vld [vmem:[%s13 + $0x28] sm:$0xff]
        %v841 = vld [vmem:[%s13 + $0x30] sm:$0xff]
        %v842 = vld [vmem:[%s13 + $0x38] sm:$0xff]
        %v843 = vld [vmem:[%s13 + $0x40] sm:$0xff]
        %v844 = vld [vmem:[%s13 + $0x48] sm:$0xff]
        %v845 = vld [vmem:[%s13 + $0x50] sm:$0xff]
        %v846 = vld [vmem:[%s13 + $0x58] sm:$0xff]
        %v847 = vld [vmem:[%s13 + $0x60] sm:$0xff]
        %v848 = vld [vmem:[%s13 + $0x68] sm:$0xff]
        %v849 = vld [vmem:[%s13 + $0x70] sm:$0xff]
        %v850 = vld [vmem:[%s13 + $0x78] sm:$0xff]
        %v851 = vld [vmem:[%s14] sm:$0x1]
        %852 = vmatprep.subr.mxu0 0.0
        %853 = vmatpush1.msra.mxu0 %v835
        %854 = vmatprep.subr.mxu0 0.0
        %855 = vmatpush1.msra.mxu0 %v836
        %856 = vmatprep.subr.mxu0 0.0
        %857 = vmatpush1.msra.mxu0 %v837
        %858 = vmatprep.subr.mxu0 0.0
        %859 = vmatpush1.msra.mxu0 %v838
        %860 = vmatprep.subr.mxu0 0.0
        %861 = vmatpush1.msra.mxu0 %v839
        %862 = vmatprep.subr.mxu0 0.0
        %863 = vmatpush1.msra.mxu0 %v840
        %864 = vmatprep.subr.mxu0 0.0
        %865 = vmatpush1.msra.mxu0 %v841
        %866 = vmatprep.subr.mxu0 0.0
        %867 = vmatpush1.msra.mxu0 %v842
        %868 = vmatprep.subr.mxu0 0.0
        %869 = vmatpush1.msra.mxu0 %v843
        %870 = vmatprep.subr.mxu0 0.0
        %871 = vmatpush1.msra.mxu0 %v844
        %872 = vmatprep.subr.mxu0 0.0
        %873 = vmatpush1.msra.mxu0 %v845
        %874 = vmatprep.subr.mxu0 0.0
        %875 = vmatpush1.msra.mxu0 %v846
        %876 = vmatprep.subr.mxu0 0.0
        %877 = vmatpush1.msra.mxu0 %v847
        %878 = vmatprep.subr.mxu0 0.0
        %879 = vmatpush1.msra.mxu0 %v848
        %880 = vmatprep.subr.mxu0 0.0
        %881 = vmatpush1.msra.mxu0 %v849
        %882 = vmatprep.subr.mxu0 0.0
        %883 = vmatpush1.msra.mxu0 %v850
        %884 = vmatprep.subr.mxu0 0.0
        %885 = vmatpush1.msra.mxu0 0.0
        %886 = vmatprep.subr.mxu0 0.0
        %887 = vmatpush1.msra.mxu0 0.0
        %888 = vmatprep.subr.mxu0 0.0
        %889 = vmatpush1.msra.mxu0 0.0
        %890 = vmatprep.subr.mxu0 0.0
        %891 = vmatpush1.msra.mxu0 0.0
        %892 = vmatprep.subr.mxu0 0.0
        %893 = vmatpush1.msra.mxu0 0.0
        %894 = vmatprep.subr.mxu0 0.0
        %895 = vmatpush1.msra.mxu0 0.0
        %896 = vmatprep.subr.mxu0 0.0
        %897 = vmatpush1.msra.mxu0 0.0
        %898 = vmatprep.subr.mxu0 0.0
        %899 = vmatpush1.msra.mxu0 0.0
        %900 = vmatprep.subr.mxu0 0.0
        %901 = vmatpush1.msra.mxu0 0.0
        %902 = vmatprep.subr.mxu0 0.0
        %903 = vmatpush1.msra.mxu0 0.0
        %904 = vmatprep.subr.mxu0 0.0
        %905 = vmatpush1.msra.mxu0 0.0
        %906 = vmatprep.subr.mxu0 0.0
        %907 = vmatpush1.msra.mxu0 0.0
        %908 = vmatprep.subr.mxu0 0.0
        %909 = vmatpush1.msra.mxu0 0.0
        %910 = vmatprep.subr.mxu0 0.0
        %911 = vmatpush1.msra.mxu0 0.0
        %912 = vmatprep.subr.mxu0 0.0
        %913 = vmatpush1.msra.mxu0 0.0
        %914 = vmatprep.subr.mxu0 0.0
        %915 = vmatpush1.msra.mxu0 0.0
        %916 = vmatprep.mubr.f32.mxu0 0.0
        %917 = vmatmul.mubr.f32.gmra.mrb[0].mxu0 %v744
        %v918 = vpop.f32.mrb[0].mxu0
        %v919 = vadd.f32 %v851, %v918
        %v920 = vpop.f32.mrb[0].mxu0
        %921 = vdwg.mxu0
        %922 = vst [vmem:[#allocation3 + $0x1] sm:$0x1] %v919
      $region88: #{discriminator_model_forward.1} parent=83 // pred_fallthru
        _
      %v923 = vld [vmem:[%s554] sm:$0xff]
      %v924 = vld [vmem:[%s554 + $0x8] sm:$0xff]
      %v925 = vld [vmem:[%s554 + $0x10] sm:$0xff]
      %v926 = vld [vmem:[%s554 + $0x18] sm:$0xff]
      %v927 = vlaneseq
      %v928 = vshrl.u32 %v927, 7
      %v929 = vadd.s32 %v928, 8
      %v930 = vadd.s32 %v928, 16
      %v931 = vadd.s32 %v928, 24
      %s932 = smul.u32 %s33, 32
      %v933 = vstv %s932
      %v934 = vadd.s32 %v928, %v933
      %v935 = vadd.s32 %v929, %v933
      %v936 = vadd.s32 %v930, %v933
      %v937 = vadd.s32 %v931, %v933
      %vm938 = vcmp.ge.s32.totalorder %v934, 4
      %vm939 = vcmp.ge.s32.totalorder %v935, 4
      %vm940 = vcmp.ge.s32.totalorder %v936, 4
      %vm941 = vcmp.ge.s32.totalorder %v937, 4
      %vm942 = vcmp.lt.s32.totalorder %v934, 28
      %vm943 = vcmp.lt.s32.totalorder %v935, 28
      %vm944 = vcmp.lt.s32.totalorder %v936, 28
      %vm945 = vcmp.lt.s32.totalorder %v937, 28
      %vm946 = vmand %vm938, %vm942
      %vm947 = vmand %vm939, %vm943
      %vm948 = vmand %vm940, %vm944
      %vm949 = vmand %vm941, %vm945
      %v950 = vsel %vm946, 1, 0
      %v951 = vsel %vm947, 1, 0
      %v952 = vsel %vm948, 1, 0
      %v953 = vsel %vm949, 1, 0
      %v954 = vcvt.s32.f32 %v950
      %v955 = vcvt.s32.f32 %v951
      %v956 = vcvt.s32.f32 %v952
      %v957 = vcvt.s32.f32 %v953
      %vm958 = vcmp.ge.s32.totalorder %v934, 2
      %vm959 = vcmp.ge.s32.totalorder %v935, 2
      %vm960 = vcmp.ge.s32.totalorder %v936, 2
      %vm961 = vcmp.ge.s32.totalorder %v937, 2
      %vm962 = vcmp.lt.s32.totalorder %v934, 30
      %vm963 = vcmp.lt.s32.totalorder %v935, 30
      %vm964 = vcmp.lt.s32.totalorder %v936, 30
      %vm965 = vcmp.lt.s32.totalorder %v937, 30
      %vm966 = vmand %vm958, %vm962
      %vm967 = vmand %vm959, %vm963
      %vm968 = vmand %vm960, %vm964
      %vm969 = vmand %vm961, %vm965
      %v970 = vsel %vm966, 1, 0
      %v971 = vsel %vm967, 1, 0
      %v972 = vsel %vm968, 1, 0
      %v973 = vsel %vm969, 1, 0
      %v974 = vcvt.s32.f32 %v970
      %v975 = vcvt.s32.f32 %v971
      %v976 = vcvt.s32.f32 %v972
      %v977 = vcvt.s32.f32 %v973
      %v978 = vld [vmem:[%s5] sm:$0x1]
      %v979 = vld [vmem:[%s6] sm:$0x1]
      %v980 = vld [vmem:[%s2] sm:$0xff]
      %v981 = vld [vmem:[%s2 + $0x8] sm:$0xff]
      %v982 = vld [vmem:[%s2 + $0x10] sm:$0xff]
      %v983 = vld [vmem:[%s2 + $0x18] sm:$0xff]
      %v984 = vld [vmem:[%s2 + $0x20] sm:$0xff]
      %v985 = vld [vmem:[%s2 + $0x28] sm:$0xff]
      %v986 = vld [vmem:[%s2 + $0x30] sm:$0xff]
      %v987 = vld [vmem:[%s2 + $0x38] sm:$0xff]
      %v988 = vld [vmem:[%s2 + $0x40] sm:$0xff]
      %v989 = vld [vmem:[%s2 + $0x48] sm:$0xff]
      %v990 = vld [vmem:[%s2 + $0x50] sm:$0xff]
      %v991 = vld [vmem:[%s2 + $0x58] sm:$0xff]
      %v992 = vld [vmem:[%s2 + $0x60] sm:$0xff]
      %v993 = vld [vmem:[%s2 + $0x68] sm:$0xff]
      %v994 = vld [vmem:[%s2 + $0x70] sm:$0xff]
      %v995 = vld [vmem:[%s2 + $0x78] sm:$0xff]
      %v997 = vlaneseq
      %v998 = vshrl.u32 %v997, 7
      %v999 = vsub.s32 0, %v998
      %v1000 = vrot.slane %v978, %v999
      %1002 = vmatprep.subr.mxu0 0.0
      %1003 = vmatpush1.msra.mxu0 %v980
      %1004 = vmatprep.subr.mxu0 0.0
      %1005 = vmatpush1.msra.mxu0 %v981
      %1006 = vmatprep.subr.mxu0 0.0
      %1007 = vmatpush1.msra.mxu0 %v982
      %1008 = vmatprep.subr.mxu0 0.0
      %1009 = vmatpush1.msra.mxu0 %v983
      %1010 = vmatprep.subr.mxu0 0.0
      %1011 = vmatpush1.msra.mxu0 %v984
      %1012 = vmatprep.subr.mxu0 0.0
      %1013 = vmatpush1.msra.mxu0 %v985
      %1014 = vmatprep.subr.mxu0 0.0
      %1015 = vmatpush1.msra.mxu0 %v986
      %1016 = vmatprep.subr.mxu0 0.0
      %1017 = vmatpush1.msra.mxu0 %v987
      %1018 = vmatprep.subr.mxu0 0.0
      %1019 = vmatpush1.msra.mxu0 %v988
      %1020 = vmatprep.subr.mxu0 0.0
      %1021 = vmatpush1.msra.mxu0 %v989
      %1022 = vmatprep.subr.mxu0 0.0
      %1023 = vmatpush1.msra.mxu0 %v990
      %1024 = vmatprep.subr.mxu0 0.0
      %1025 = vmatpush1.msra.mxu0 %v991
      %1026 = vmatprep.subr.mxu0 0.0
      %1027 = vmatpush1.msra.mxu0 %v992
      %1028 = vmatprep.subr.mxu0 0.0
      %1029 = vmatpush1.msra.mxu0 %v993
      %1030 = vmatprep.subr.mxu0 0.0
      %1031 = vmatpush1.msra.mxu0 %v994
      %1032 = vmatprep.subr.mxu0 0.0
      %1033 = vmatpush1.msra.mxu0 %v995
      %1034 = vmatprep.subr.mxu0 0.0
      %1035 = vmatpush1.msra.mxu0 0.0
      %1036 = vmatprep.subr.mxu0 0.0
      %1037 = vmatpush1.msra.mxu0 0.0
      %1038 = vmatprep.subr.mxu0 0.0
      %1039 = vmatpush1.msra.mxu0 0.0
      %1040 = vmatprep.subr.mxu0 0.0
      %1041 = vmatpush1.msra.mxu0 0.0
      %1042 = vmatprep.subr.mxu0 0.0
      %1043 = vmatpush1.msra.mxu0 0.0
      %1044 = vmatprep.subr.mxu0 0.0
      %1045 = vmatpush1.msra.mxu0 0.0
      %1046 = vmatprep.subr.mxu0 0.0
      %1047 = vmatpush1.msra.mxu0 0.0
      %1048 = vmatprep.subr.mxu0 0.0
      %1049 = vmatpush1.msra.mxu0 0.0
      %1050 = vmatprep.subr.mxu0 0.0
      %1051 = vmatpush1.msra.mxu0 0.0
      %1052 = vmatprep.subr.mxu0 0.0
      %1053 = vmatpush1.msra.mxu0 0.0
      %1054 = vmatprep.subr.mxu0 0.0
      %1055 = vmatpush1.msra.mxu0 0.0
      %1056 = vmatprep.subr.mxu0 0.0
      %1057 = vmatpush1.msra.mxu0 0.0
      %1058 = vmatprep.subr.mxu0 0.0
      %1059 = vmatpush1.msra.mxu0 0.0
      %1060 = vmatprep.subr.mxu0 0.0
      %1061 = vmatpush1.msra.mxu0 0.0
      %1062 = vmatprep.subr.mxu0 0.0
      %1063 = vmatpush1.msra.mxu0 0.0
      %1064 = vmatprep.subr.mxu0 0.0
      %1065 = vmatpush1.msra.mxu0 0.0
      %1066 = vmatprep.mubr.f32.mxu0 0.0
      %1067 = vmatmul.mubr.f32.gmra.mrb[0].mxu0 %v923
      %v1068 = vpop.f32.mrb[0].mxu0
      %v1069 = vadd.f32 %v1000, %v1068
      %v1070 = vpop.f32.mrb[0].mxu0
      %1071 = vmatprep.mubr.f32.mxu0 0.0
      %1072 = vmatmul.mubr.f32.gmra.mrb[0].mxu0 %v924
      %v1073 = vpop.f32.mrb[0].mxu0
      %v1074 = vadd.f32 %v1000, %v1073
      %v1075 = vpop.f32.mrb[0].mxu0
      %1076 = vmatprep.mubr.f32.mxu0 0.0
      %1077 = vmatmul.mubr.f32.gmra.mrb[0].mxu0 %v925
      %v1078 = vpop.f32.mrb[0].mxu0
      %v1079 = vadd.f32 %v1000, %v1078
      %v1080 = vpop.f32.mrb[0].mxu0
      %1081 = vmatprep.mubr.f32.mxu0 0.0
      %1082 = vmatmul.mubr.f32.gmra.mrb[0].mxu0 %v926
      %v1083 = vpop.f32.mrb[0].mxu0
      %v1084 = vadd.f32 %v1000, %v1083
      %v1085 = vpop.f32.mrb[0].mxu0
      %1086 = vdwg.mxu0
      %vm1087 = vcmp.gt.f32.partialorder %v1069, 0.0
      %vm1088 = vcmp.gt.f32.partialorder %v1074, 0.0
      %vm1089 = vcmp.gt.f32.partialorder %v1079, 0.0
      %vm1090 = vcmp.gt.f32.partialorder %v1084, 0.0
      %v1091 = vmul.f32 %v1069, 0.2
      %v1092 = vmul.f32 %v1074, 0.2
      %v1093 = vmul.f32 %v1079, 0.2
      %v1094 = vmul.f32 %v1084, 0.2
      %v1095 = vsel %vm1087, %v1069, %v1091
      %v1096 = vsel %vm1088, %v1074, %v1092
      %v1097 = vsel %vm1089, %v1079, %v1093
      %v1098 = vsel %vm1090, %v1084, %v1094
      %v1099 = vld [vmem:[#allocation2] sm:$0x1]
      %v1101 = vlaneseq
      %v1102 = vshrl.u32 %v1101, 7
      %v1103 = vsub.s32 0, %v1102
      %v1104 = vrot.slane %v979, %v1103
      %v1106 = vmul.f32 %v1095, %v1104
      %v1107 = vmul.f32 %v1096, %v1104
      %v1108 = vmul.f32 %v1097, %v1104
      %v1109 = vmul.f32 %v1098, %v1104
      %v1110 = vmul.f32 %v954, %v1106
      %v1111 = vmul.f32 %v955, %v1107
      %v1112 = vmul.f32 %v956, %v1108
      %v1113 = vmul.f32 %v957, %v1109
      %v1114 = vadd.f32 %v1110, %v1111
      %v1115 = vadd.f32 %v1114, %v1112
      %v1116 = vadd.f32 %v1115, %v1113
      %v1117 = vrot.slane %v1116, 4
      %v1118 = vadd.f32 %v1116, %v1117
      %v1119 = vrot.slane %v1118, 2
      %v1120 = vadd.f32 %v1118, %v1119
      %v1121 = vrot.slane %v1120, 1
      %v1122 = vadd.f32 %v1120, %v1121
      %v1123 = vadd.f32 %v1099, %v1122
      %1124 = vst [vmem:[#allocation2] sm:$0x1] %v1123
      %v1125 = vsel %vm1087, 1.0, 0.2
      %v1126 = vsel %vm1088, 1.0, 0.2
      %v1127 = vsel %vm1089, 1.0, 0.2
      %v1128 = vsel %vm1090, 1.0, 0.2
      %v1129 = vmul.f32 %v1125, %v1104
      %v1130 = vmul.f32 %v1126, %v1104
      %v1131 = vmul.f32 %v1127, %v1104
      %v1132 = vmul.f32 %v1128, %v1104
      %v1133 = vld [vmem:[%s4] sm:$0xff]
      %v1134 = vld [vmem:[%s4 + $0x8] sm:$0xff]
      %v1135 = vld [vmem:[%s4 + $0x10] sm:$0xff]
      %v1136 = vld [vmem:[%s4 + $0x18] sm:$0xff]
      %v1137 = vld [vmem:[%s4 + $0x20] sm:$0xff]
      %v1138 = vld [vmem:[%s4 + $0x28] sm:$0xff]
      %v1139 = vld [vmem:[%s4 + $0x30] sm:$0xff]
      %v1140 = vld [vmem:[%s4 + $0x38] sm:$0xff]
      %v1141 = vld [vmem:[%s4 + $0x40] sm:$0xff]
      %v1142 = vld [vmem:[%s4 + $0x48] sm:$0xff]
      %v1143 = vld [vmem:[%s4 + $0x50] sm:$0xff]
      %v1144 = vld [vmem:[%s4 + $0x58] sm:$0xff]
      %v1145 = vld [vmem:[%s4 + $0x60] sm:$0xff]
      %v1146 = vld [vmem:[%s4 + $0x68] sm:$0xff]
      %v1147 = vld [vmem:[%s4 + $0x70] sm:$0xff]
      %v1148 = vld [vmem:[%s4 + $0x78] sm:$0xff]
      %1149 = vmatprep.subr.mxu0 0.0
      %1150 = vmatpush1.msra.mxu0 %v1133
      %1151 = vmatprep.subr.mxu0 0.0
      %1152 = vmatpush1.msra.mxu0 %v1134
      %1153 = vmatprep.subr.mxu0 0.0
      %1154 = vmatpush1.msra.mxu0 %v1135
      %1155 = vmatprep.subr.mxu0 0.0
      %1156 = vmatpush1.msra.mxu0 %v1136
      %1157 = vmatprep.subr.mxu0 0.0
      %1158 = vmatpush1.msra.mxu0 %v1137
      %1159 = vmatprep.subr.mxu0 0.0
      %1160 = vmatpush1.msra.mxu0 %v1138
      %1161 = vmatprep.subr.mxu0 0.0
      %1162 = vmatpush1.msra.mxu0 %v1139
      %1163 = vmatprep.subr.mxu0 0.0
      %1164 = vmatpush1.msra.mxu0 %v1140
      %1165 = vmatprep.subr.mxu0 0.0
      %1166 = vmatpush1.msra.mxu0 %v1141
      %1167 = vmatprep.subr.mxu0 0.0
      %1168 = vmatpush1.msra.mxu0 %v1142
      %1169 = vmatprep.subr.mxu0 0.0
      %1170 = vmatpush1.msra.mxu0 %v1143
      %1171 = vmatprep.subr.mxu0 0.0
      %1172 = vmatpush1.msra.mxu0 %v1144
      %1173 = vmatprep.subr.mxu0 0.0
      %1174 = vmatpush1.msra.mxu0 %v1145
      %1175 = vmatprep.subr.mxu0 0.0
      %1176 = vmatpush1.msra.mxu0 %v1146
      %1177 = vmatprep.subr.mxu0 0.0
      %1178 = vmatpush1.msra.mxu0 %v1147
      %1179 = vmatprep.subr.mxu0 0.0
      %1180 = vmatpush1.msra.mxu0 %v1148
      %1181 = vmatprep.subr.mxu0 0.0
      %1182 = vmatpush1.msra.mxu0 0.0
      %1183 = vmatprep.subr.mxu0 0.0
      %1184 = vmatpush1.msra.mxu0 0.0
      %1185 = vmatprep.subr.mxu0 0.0
      %1186 = vmatpush1.msra.mxu0 0.0
      %1187 = vmatprep.subr.mxu0 0.0
      %1188 = vmatpush1.msra.mxu0 0.0
      %1189 = vmatprep.subr.mxu0 0.0
      %1190 = vmatpush1.msra.mxu0 0.0
      %1191 = vmatprep.subr.mxu0 0.0
      %1192 = vmatpush1.msra.mxu0 0.0
      %1193 = vmatprep.subr.mxu0 0.0
      %1194 = vmatpush1.msra.mxu0 0.0
      %1195 = vmatprep.subr.mxu0 0.0
      %1196 = vmatpush1.msra.mxu0 0.0
      %1197 = vmatprep.subr.mxu0 0.0
      %1198 = vmatpush1.msra.mxu0 0.0
      %1199 = vmatprep.subr.mxu0 0.0
      %1200 = vmatpush1.msra.mxu0 0.0
      %1201 = vmatprep.subr.mxu0 0.0
      %1202 = vmatpush1.msra.mxu0 0.0
      %1203 = vmatprep.subr.mxu0 0.0
      %1204 = vmatpush1.msra.mxu0 0.0
      %1205 = vmatprep.subr.mxu0 0.0
      %1206 = vmatpush1.msra.mxu0 0.0
      %1207 = vmatprep.subr.mxu0 0.0
      %1208 = vmatpush1.msra.mxu0 0.0
      %1209 = vmatprep.subr.mxu0 0.0
      %1210 = vmatpush1.msra.mxu0 0.0
      %1211 = vmatprep.subr.mxu0 0.0
      %1212 = vmatpush1.msra.mxu0 0.0
      %1213 = vmatprep.mubr.f32.mxu0 0.0
      %1214 = vmatmul.mubr.f32.gmra.mrb[0].mxu0 %v1129
      %v1215 = vpop.f32.mrb[0].mxu0
      %v1216 = vadd.f32 0.0, %v1215
      %v1217 = vpop.f32.mrb[0].mxu0
      %1218 = vmatprep.mubr.f32.mxu0 0.0
      %1219 = vmatmul.mubr.f32.gmra.mrb[0].mxu0 %v1130
      %v1220 = vpop.f32.mrb[0].mxu0
      %v1221 = vadd.f32 0.0, %v1220
      %v1222 = vpop.f32.mrb[0].mxu0
      %1223 = vmatprep.mubr.f32.mxu0 0.0
      %1224 = vmatmul.mubr.f32.gmra.mrb[0].mxu0 %v1131
      %v1225 = vpop.f32.mrb[0].mxu0
      %v1226 = vadd.f32 0.0, %v1225
      %v1227 = vpop.f32.mrb[0].mxu0
      %1228 = vmatprep.mubr.f32.mxu0 0.0
      %1229 = vmatmul.mubr.f32.gmra.mrb[0].mxu0 %v1132
      %v1230 = vpop.f32.mrb[0].mxu0
      %v1231 = vadd.f32 0.0, %v1230
      %v1232 = vpop.f32.mrb[0].mxu0
      %1233 = vdwg.mxu0
      %v1234 = vld [vmem:[#allocation2 + $0x2] sm:$0x1]
      %v1235 = vmul.f32 %v1216, %v1216
      %v1236 = vmul.f32 %v1221, %v1221
      %v1237 = vmul.f32 %v1226, %v1226
      %v1238 = vmul.f32 %v1231, %v1231
      %v1239 = vmul.f32 %v954, %v1235
      %v1240 = vmul.f32 %v955, %v1236
      %v1241 = vmul.f32 %v956, %v1237
      %v1242 = vmul.f32 %v957, %v1238
      %v1243 = vadd.f32 %v1239, %v1240
      %v1244 = vadd.f32 %v1243, %v1241
      %v1245 = vadd.f32 %v1244, %v1242
      %v1246 = vrot.slane %v1245, 4
      %v1247 = vadd.f32 %v1245, %v1246
      %v1248 = vrot.slane %v1247, 2
      %v1249 = vadd.f32 %v1247, %v1248
      %v1250 = vrot.slane %v1249, 1
      %v1251 = vadd.f32 %v1249, %v1250
      %v1252 = vadd.f32 %v1234, %v1251
      %1253 = vst [vmem:[#allocation2 + $0x2] sm:$0x1] %v1252
      %v1254 = vld [vmem:[#allocation3] sm:$0x1]
      %v1255 = vld [vmem:[#allocation3 + $0x1] sm:$0x1]
      %v1256 = vtanh.pop %v923
      %v1257 = vtanh.pop %v924
      %v1258 = vtanh.pop %v925
      %v1259 = vtanh.pop %v926
      %v1260 = vadd.f32 %v1254, 1.0
      %v1261 = vlaneseq
      %v1262 = vshrl.u32 %v1261, 7
      %v1263 = vsub.s32 0, %v1262
      %v1264 = vrot.slane %v1260, %v1263
      %v1265 = vmul.f32 %v1256, %v1264
      %v1266 = vmul.f32 %v1257, %v1264
      %v1267 = vmul.f32 %v1258, %v1264
      %v1268 = vmul.f32 %v1259, %v1264
      %v1269 = vlaneseq
      %v1270 = vshrl.u32 %v1269, 7
      %v1271 = vsub.s32 0, %v1270
      %v1272 = vrot.slane %v1255, %v1271
      %v1273 = vadd.f32 %v1265, %v1272
      %v1274 = vadd.f32 %v1266, %v1272
      %v1275 = vadd.f32 %v1267, %v1272
      %v1276 = vadd.f32 %v1268, %v1272
      %v1277 = vpack.c.bf16 %v1274, %v1273
      %v1278 = vpack.c.bf16 %v1276, %v1275
      %v1279 = vld [vmem:[%s3] sm:$0xf]
      %v1280 = vld [vmem:[%s3 + $0x4] sm:$0xf]
      %v1281 = vld [vmem:[%s3 + $0x8] sm:$0xf]
      %v1282 = vld [vmem:[%s3 + $0xc] sm:$0xf]
      %v1283 = vld [vmem:[%s3 + $0x10] sm:$0xf]
      %v1284 = vld [vmem:[%s3 + $0x14] sm:$0xf]
      %v1285 = vld [vmem:[%s3 + $0x18] sm:$0xf]
      %v1286 = vld [vmem:[%s3 + $0x1c] sm:$0xf]
      %v1287 = vld [vmem:[%s3 + $0x20] sm:$0xf]
      %v1288 = vld [vmem:[%s3 + $0x24] sm:$0xf]
      %v1289 = vld [vmem:[%s3 + $0x28] sm:$0xf]
      %v1290 = vld [vmem:[%s3 + $0x2c] sm:$0xf]
      %v1291 = vld [vmem:[%s3 + $0x30] sm:$0xf]
      %v1292 = vld [vmem:[%s3 + $0x34] sm:$0xf]
      %v1293 = vld [vmem:[%s3 + $0x38] sm:$0xf]
      %v1294 = vld [vmem:[%s3 + $0x3c] sm:$0xf]
      %v1311 = vunpack.c.l.b16 %v1279
      %v1312 = vunpack.c.l.b16 %v1280
      %v1313 = vunpack.c.l.b16 %v1281
      %v1314 = vunpack.c.l.b16 %v1282
      %v1315 = vunpack.c.l.b16 %v1283
      %v1316 = vunpack.c.l.b16 %v1284
      %v1317 = vunpack.c.l.b16 %v1285
      %v1318 = vunpack.c.l.b16 %v1286
      %v1319 = vunpack.c.l.b16 %v1287
      %v1320 = vunpack.c.l.b16 %v1288
      %v1321 = vunpack.c.l.b16 %v1289
      %v1322 = vunpack.c.l.b16 %v1290
      %v1323 = vunpack.c.l.b16 %v1291
      %v1324 = vunpack.c.l.b16 %v1292
      %v1325 = vunpack.c.l.b16 %v1293
      %v1326 = vunpack.c.l.b16 %v1294
      %v1327 = vpack.c.b16 %v1312, %v1311
      %v1328 = vpack.c.b16 %v1314, %v1313
      %v1329 = vpack.c.b16 %v1316, %v1315
      %v1330 = vpack.c.b16 %v1318, %v1317
      %v1331 = vpack.c.b16 %v1320, %v1319
      %v1332 = vpack.c.b16 %v1322, %v1321
      %v1333 = vpack.c.b16 %v1324, %v1323
      %v1334 = vpack.c.b16 %v1326, %v1325
      %1343 = vmatprep.subr.bf16.mxu0 0
      %1344 = vmatpush1.bf16.msra.mxu0 %v1327
      %1345 = vmatprep.subr.bf16.mxu0 0
      %1346 = vmatpush1.bf16.msra.mxu0 %v1328
      %1347 = vmatprep.subr.bf16.mxu0 0
      %1348 = vmatpush1.bf16.msra.mxu0 %v1329
      %1349 = vmatprep.subr.bf16.mxu0 0
      %1350 = vmatpush1.bf16.msra.mxu0 %v1330
      %1351 = vmatprep.subr.bf16.mxu0 0
      %1352 = vmatpush1.bf16.msra.mxu0 %v1331
      %1353 = vmatprep.subr.bf16.mxu0 0
      %1354 = vmatpush1.bf16.msra.mxu0 %v1332
      %1355 = vmatprep.subr.bf16.mxu0 0
      %1356 = vmatpush1.bf16.msra.mxu0 %v1333
      %1357 = vmatprep.subr.bf16.mxu0 0
      %1358 = vmatpush1.bf16.msra.mxu0 %v1334
      %1359 = vmatprep.subr.bf16.mxu0 0
      %1360 = vmatpush1.bf16.msra.mxu0 0
      %1361 = vmatprep.subr.bf16.mxu0 0
      %1362 = vmatpush1.bf16.msra.mxu0 0
      %1363 = vmatprep.subr.bf16.mxu0 0
      %1364 = vmatpush1.bf16.msra.mxu0 0
      %1365 = vmatprep.subr.bf16.mxu0 0
      %1366 = vmatpush1.bf16.msra.mxu0 0
      %1367 = vmatprep.subr.bf16.mxu0 0
      %1368 = vmatpush1.bf16.msra.mxu0 0
      %1369 = vmatprep.subr.bf16.mxu0 0
      %1370 = vmatpush1.bf16.msra.mxu0 0
      %1371 = vmatprep.subr.bf16.mxu0 0
      %1372 = vmatpush1.bf16.msra.mxu0 0
      %1373 = vmatprep.subr.bf16.mxu0 0
      %1374 = vmatpush1.bf16.msra.mxu0 0
      %1375 = vmatprep.mubr.bf16.mxu0 0
      %1376 = vmatmul.mubr.bf16.gmra.mrb[0].mxu0 %v1277
      %v1377 = vpop.f32.mrb[0].mxu0
      %v1378 = vadd.f32 %v1000, %v1377
      %v1379 = vpop.f32.mrb[0].mxu0
      %v1380 = vpop.f32.mrb[0].mxu0
      %v1381 = vadd.f32 %v1000, %v1380
      %v1382 = vpop.f32.mrb[0].mxu0
      %1383 = vmatprep.mubr.bf16.mxu0 0
      %1384 = vmatmul.mubr.bf16.gmra.mrb[0].mxu0 %v1278
      %v1385 = vpop.f32.mrb[0].mxu0
      %v1386 = vadd.f32 %v1000, %v1385
      %v1387 = vpop.f32.mrb[0].mxu0
      %v1388 = vpop.f32.mrb[0].mxu0
      %v1389 = vadd.f32 %v1000, %v1388
      %v1390 = vpop.f32.mrb[0].mxu0
      %1391 = vdwg.mxu0
      %vm1392 = vcmp.gt.f32.partialorder %v1378, 0.0
      %vm1393 = vcmp.gt.f32.partialorder %v1381, 0.0
      %vm1394 = vcmp.gt.f32.partialorder %v1386, 0.0
      %vm1395 = vcmp.gt.f32.partialorder %v1389, 0.0
      %v1396 = vmul.f32 %v1378, 0.2
      %v1397 = vmul.f32 %v1381, 0.2
      %v1398 = vmul.f32 %v1386, 0.2
      %v1399 = vmul.f32 %v1389, 0.2
      %v1400 = vsel %vm1392, %v1378, %v1396
      %v1401 = vsel %vm1393, %v1381, %v1397
      %v1402 = vsel %vm1394, %v1386, %v1398
      %v1403 = vsel %vm1395, %v1389, %v1399
      %v1404 = vld [vmem:[#allocation2 + $0x1] sm:$0x1]
      %v1405 = vmul.f32 %v1400, %v1104
      %v1406 = vmul.f32 %v1401, %v1104
      %v1407 = vmul.f32 %v1402, %v1104
      %v1408 = vmul.f32 %v1403, %v1104
      %v1409 = vmul.f32 %v974, %v1405
      %v1410 = vmul.f32 %v975, %v1406
      %v1411 = vmul.f32 %v976, %v1407
      %v1412 = vmul.f32 %v977, %v1408
      %v1413 = vadd.f32 %v1409, %v1410
      %v1414 = vadd.f32 %v1413, %v1411
      %v1415 = vadd.f32 %v1414, %v1412
      %v1416 = vrot.slane %v1415, 4
      %v1417 = vadd.f32 %v1415, %v1416
      %v1418 = vrot.slane %v1417, 2
      %v1419 = vadd.f32 %v1417, %v1418
      %v1420 = vrot.slane %v1419, 1
      %v1421 = vadd.f32 %v1419, %v1420
      %v1422 = vadd.f32 %v1404, %v1421
      %1423 = vst [vmem:[#allocation2 + $0x1] sm:$0x1] %v1422
      // Predicated region
      $region89: #{discriminator_model_forward.1} parent=83 // pred_check
        %p1424 = pneg %p564
      $region90: #{discriminator_model_forward.1} parent=83 // pred_check_branch
        %1426 = sbr.rel (%p1424) target = $region92
      $region91: #{discriminator_model_forward.1} parent=83 // pred_region
        %s1427 = sld [smem:[#allocation4]]
        %v1428 = vld [vmem:[#allocation2] sm:$0x1]
        %vm1429 = vcmask 1040384
        %v1430 = vsel %vm1429, %v1428, 0.0
        %1431 = vadd.xlane.f32.xlu0 %v1430
        %v1432 = vpop.xlane.xlu0 %1431
        %v1433 = vmul.f32 %v1432, 0.041666668
        %v1434 = vstv %s1427
        %v1435 = vadd.f32 %v1433, %v1434
        %v1436 = vld [vmem:[#allocation2 + $0x1] sm:$0x1]
        %v1437 = vsel %vm1429, %v1436, 0.0
        %1438 = vadd.xlane.f32.xlu0 %v1437
        %v1439 = vpop.xlane.xlu0 %1438
        %v1440 = vmul.f32 %v1439, 0.035714287
        %v1441 = vadd.f32 %v1440, %v1434
        %v1442 = vld [vmem:[#allocation2 + $0x2] sm:$0x1]
        %v1443 = vsel %vm1429, %v1442, 0.0
        %1444 = vadd.xlane.f32.xlu0 %v1443
        %v1445 = vpop.xlane.xlu0 %1444
        %v1446 = vmul.f32 %v1445, 0.0017361111
        %v1447 = vsub.f32 0.0, %v1435
        %v1448 = vmax.f32 %v1447, 0.0
        %v1449 = vand.u32 2147483647, %v1447
        %v1450 = vsub.f32 0.0, %v1449
        %v1451 = vmul.f32 %v1450, 1.442695
        %v1452 = vpow.pop %v1451
        %v1453 = vadd.f32 %v1452, 1.0
        %v1454 = vlog2.pop %v1453
        %v1455 = vmul.f32 %v1454, 0.6931472
        %v1456 = vadd.f32 %v1448, %v1455
        %v1457 = vmax.f32 %v1441, 0.0
        %v1458 = vand.u32 2147483647, %v1441
        %v1459 = vsub.f32 0.0, %v1458
        %v1460 = vmul.f32 %v1459, 1.442695
        %v1461 = vpow.pop %v1460
        %v1462 = vadd.f32 %v1461, 1.0
        %v1463 = vlog2.pop %v1462
        %v1464 = vmul.f32 %v1463, 0.6931472
        %v1465 = vadd.f32 %v1457, %v1464
        %v1466 = vlaneseq
        %v1467 = vand.u32 %v1466, 127
        %vm1468 = vcmp.eq.s32.totalorder %v928, 0
        %vm1469 = vcmp.eq.s32.totalorder %v1467, 0
        %vm1470 = vmand %vm1468, %vm1469
        %v1471 = vsel %vm1470, 1, 0
        %v1472 = vcvt.s32.f32 %v1471
        %v1473 = vlaneseq
        %v1474 = vshrl.u32 %v1473, 7
        %v1475 = vsub.s32 0, %v1474
        %v1476 = vrot.slane %v1456, %v1475
        %v1477 = vmul.f32 %v1476, %v1472
        %vm1478 = vcmp.eq.s32.totalorder %v1467, 1
        %vm1479 = vmand %vm1468, %vm1478
        %v1480 = vsel %vm1479, 1, 0
        %v1481 = vcvt.s32.f32 %v1480
        %v1482 = vlaneseq
        %v1483 = vshrl.u32 %v1482, 7
        %v1484 = vsub.s32 0, %v1483
        %v1485 = vrot.slane %v1465, %v1484
        %v1486 = vmul.f32 %v1485, %v1481
        %v1487 = vadd.f32 %v1477, %v1486
        %vm1488 = vcmp.eq.s32.totalorder %v1467, 2
        %vm1489 = vmand %vm1468, %vm1488
        %v1490 = vsel %vm1489, 1, 0
        %v1491 = vcvt.s32.f32 %v1490
        %v1492 = vlaneseq
        %v1493 = vshrl.u32 %v1492, 7
        %v1494 = vsub.s32 0, %v1493
        %v1495 = vrot.slane %v1446, %v1494
        %v1496 = vmul.f32 %v1495, %v1491
        %v1497 = vadd.f32 %v1487, %v1496
        %1498 = vst [vmem:[%s562] sm:$0xff] %v1497
      $region92: #{discriminator_model_forward.1} parent=83 // pred_fallthru
        _
      %p1499 = scmp.lt.s32.totalorder %s32, 1
      %s1500 = scalar_select %p1499, %s32, 1
      %s1501 = smul.addr %s1500, 8
      %s1502 = scalar_lea.vmem %s16, %s1501
      // Predicated region
      $region93: #{discriminator_model_forward.1} parent=83 // pred_check
        %p1503 = pneg %p406
      $region94: #{discriminator_model_forward.1} parent=83 // pred_check_branch
        %1505 = sbr.rel (%p1503) target = $region96
      $region95: #{discriminator_model_forward.1} parent=83 // pred_region
        _
      $region96: #{discriminator_model_forward.1} parent=83 // pred_fallthru
        _
    $region84: #{discriminator_model_forward.1} parent=5 // pred_fallthru
      _
    %p1506 = scmp.le.s32.totalorder 2, %s23
    // Predicated region
    $region97: #{discriminator_model_forward.1} parent=5 // pred_check
      %p1507 = pneg %p1506
    $region98: #{discriminator_model_forward.1} parent=5 // pred_check_branch
      %1509 = sbr.rel (%p1507) target = $region100
    $region99: #{discriminator_model_forward.1} parent=5 // pred_region
      %s1510 = ssub.s32 %s23, 2
      // Predicated region
      $region101: #{discriminator_model_forward.1} parent=99 // pred_check
        %p1511 = pneg %p412
      $region102: #{discriminator_model_forward.1} parent=99 // pred_check_branch
        %1513 = sbr.rel (%p1511) target = $region104
      $region103: #{discriminator_model_forward.1} parent=99 // pred_region
        %p1514 = scmp.lt.s32.totalorder %s34, 1
        %s1515 = scalar_select %p1514, %s34, 1
        %s1516 = smul.addr %s1515, 8
        %s1517 = scalar_lea.vmem %s16, %s1516
      $region104: #{discriminator_model_forward.1} parent=99 // pred_fallthru
        _
    $region100: #{discriminator_model_forward.1} parent=5 // pred_fallthru
      _
  $region6: #{discriminator_model_forward.1} parent=0 // loop_footer
    %s27 = sadd.s32 1, %s23
  $region7: #{discriminator_model_forward.1} parent=0 // loop_footer_branch
    %22 = sbr.rel target = $region3
  $region8: #{discriminator_model_forward.1} parent=0 // loop_exit
    _

</llo_original>
